<compile_context>
chip_gen: v7x
topology: tpu7x:2x2x1
jax: 0.10.0
libtpu: 0.0.40
codegen_flags: <defaults>
</compile_context>

<pallas_src>
import math
import jax
import jax.numpy as jnp
from jax import lax
from jax.experimental import pallas as pl
from jax.experimental.pallas import tpu as pltpu

# ---- "config" (small, synthetic) ----
HIDDEN = 32          # config.hidden_size
HEADS = 4            # config.num_attention_heads
HEAD_DIM = HIDDEN // HEADS
NUM_EXPERTS = 4      # config.num_experts
TOP_K = 2            # config.num_experts_per_tok
EXPERT_FFN = 64      # config.expert_intermediate_size
SHARED_FFN = 64      # config.shared_expert_intermediate_size
EPS = 1e-5           # config.layer_norm_eps
BATCH = 2
SEQ = 8

QKV_W = 3 * HIDDEN                                   # 96
QKV_PAD = ((QKV_W + 127) // 128) * 128               # 128  (lane-dense fused QKV matmul)
FFN_TOTAL = NUM_EXPERTS * EXPERT_FFN + SHARED_FFN    # 320  (routed experts + shared expert)
ROUTER_LO = FFN_TOTAL                                # 320  (router columns live here)
UP_COLS = FFN_TOTAL + NUM_EXPERTS                    # 324  (experts | shared | router)
FFN_PAD = ((UP_COLS + 127) // 128) * 128             # 384  (lane-dense fused FFN matmuls)
OUT_PAD = 128                                        # packed output width (y | logits | pad)

# ---- small-parameter slab layout (rows of a (SLAB_ROWS, FFN_PAD) f32 array) ----
ROW_LN1_G = 0
ROW_LN1_B = 1
ROW_BQKV = 2          # fused QKV bias (128 lanes, scale folded into q part)
ROW_BO = 3            # attention out-proj bias
ROW_LN2_G = 4
ROW_LN2_B = 5
ROW_B1S = 6           # stacked up-proj bias (experts | shared | router)
ROW_SHMASK = 7        # ones over shared-expert lanes [256:320)
ROW_BS2 = 8           # shared down-proj bias
ROW_BE2 = 9           # rows 9..12: expert down-proj biases (E, D)
ROW_SEL = 13          # rows 13..16: gate->lane selector (E, FFN_PAD)
SLAB_ROWS = 24        # padded to a multiple of 8 sublanes


def _layer_norm(v, g, b):
    mu = jnp.mean(v, axis=-1, keepdims=True)
    var = jnp.mean((v - mu) ** 2, axis=-1, keepdims=True)
    return (v - mu) * lax.rsqrt(var + EPS) * g + b


def _gelu(v):
    # tanh-approximate GELU (expert_activation = "gelu")
    c = math.sqrt(2.0 / math.pi)
    return 0.5 * v * (1.0 + jnp.tanh(c * (v + 0.044715 * v * v * v)))


def sparse_layer_kernel(x_ref, wqkv_ref, wo_ref, w1s_ref, w2s_ref, slab_ref, out_ref):
    x = x_ref[...]                                            # (N, D) f32, N = B*S

    # ---------------- attention block ----------------
    ln1_g = slab_ref[ROW_LN1_G:ROW_LN1_G + 1, :HIDDEN]        # (1, D)
    ln1_b = slab_ref[ROW_LN1_B:ROW_LN1_B + 1, :HIDDEN]
    xn = _layer_norm(x, ln1_g, ln1_b)                         # (N, D)

    # fused QKV projection: one (N, D) x (D, 128) matmul (cols: q*scale | k | v | zero-pad)
    bqkv = slab_ref[ROW_BQKV:ROW_BQKV + 1, :QKV_PAD]          # (1, 128)
    qkv = jnp.dot(xn, wqkv_ref[...], preferred_element_type=jnp.float32) + bqkv
    qkv3 = qkv.reshape(BATCH, SEQ, QKV_PAD)                   # (B, S, 128)

    # per-head QK^T (scale already folded into the Q weights); ONE softmax over all heads
    scores = []
    for h in range(HEADS):                                    # static loop, H = 4
        lo = h * HEAD_DIM
        qh = qkv3[:, :, lo:lo + HEAD_DIM]                     # (B, S, hd)
        kh = qkv3[:, :, HIDDEN + lo:HIDDEN + lo + HEAD_DIM]
        scores.append(jnp.einsum('bqd,bkd->bqk', qh, kh,
                                 preferred_element_type=jnp.float32))     # (B, S, S)
    s_all = jnp.concatenate(scores, axis=0)                   # (H*B, S, S)
    s_all = s_all - jnp.max(s_all, axis=-1, keepdims=True)
    p_all = jnp.exp(s_all)
    p_all = p_all * pl.reciprocal(jnp.sum(p_all, axis=-1, keepdims=True), approx=True)

    ctx_heads = []
    for h in range(HEADS):
        lo = 2 * HIDDEN + h * HEAD_DIM
        vh = qkv3[:, :, lo:lo + HEAD_DIM]                     # (B, S, hd)
        ph = p_all[h * BATCH:(h + 1) * BATCH]                 # (B, S, S)
        ctx_heads.append(jnp.einsum('bqk,bkd->bqd', ph, vh,
                                    preferred_element_type=jnp.float32))  # (B, S, hd)
    ctx = jnp.concatenate(ctx_heads, axis=-1).reshape(x.shape[0], HIDDEN)  # (N, D)

    # single fused output projection
    bo = slab_ref[ROW_BO:ROW_BO + 1, :HIDDEN]
    attn_o = jnp.dot(ctx, wo_ref[...], preferred_element_type=jnp.float32) + bo
    x1 = x + attn_o                                           # residual (attn_dropout = id)

    # ---------------- sparse FFN block ----------------
    ln2_g = slab_ref[ROW_LN2_G:ROW_LN2_G + 1, :HIDDEN]
    ln2_b = slab_ref[ROW_LN2_B:ROW_LN2_B + 1, :HIDDEN]
    xn2 = _layer_norm(x1, ln2_g, ln2_b)                       # (N, D)

    # fused up-proj + router: one (N, D) x (D, 384) matmul
    #   cols: e0 | e1 | e2 | e3 | shared | router (320:324) | zero-pad
    b1s = slab_ref[ROW_B1S:ROW_B1S + 1, :]                    # (1, 384)
    pre = jnp.dot(xn2, w1s_ref[...], preferred_element_type=jnp.float32) + b1s   # (N, 384)
    logits = pre[:, ROUTER_LO:ROUTER_LO + NUM_EXPERTS]        # (N, E), pre-GELU (router_dtype=f32)

    # router softmax
    lmax = jnp.max(logits, axis=-1, keepdims=True)
    pe = jnp.exp(logits - lmax)
    probs = pe * pl.reciprocal(jnp.sum(pe, axis=-1, keepdims=True), approx=True)

    # top-k gating via iterative argmax (E is tiny; static TOP_K iterations)
    idx = lax.broadcasted_iota(jnp.int32, probs.shape, 1)
    remaining = probs
    gate = jnp.zeros_like(probs)
    for _ in range(TOP_K):
        m = jnp.max(remaining, axis=-1, keepdims=True)
        is_max = remaining == m
        min_idx = jnp.min(jnp.where(is_max, idx, NUM_EXPERTS), axis=-1, keepdims=True)
        pick = idx == min_idx
        gate = jnp.where(pick, probs, gate)
        remaining = jnp.where(pick, -jnp.inf, remaining)
    gate = gate * pl.reciprocal(jnp.sum(gate, axis=-1, keepdims=True), approx=True)

    # gate expansion to the 384 FFN lanes: one (N, E) x (E, 384) matmul against a constant
    # selector (+ additive ones over the shared-expert lanes; router/pad lanes stay 0)
    sel = slab_ref[ROW_SEL:ROW_SEL + NUM_EXPERTS, :]          # (E, 384)
    shmask = slab_ref[ROW_SHMASK:ROW_SHMASK + 1, :]           # (1, 384)
    gate_full = jnp.dot(gate, sel, preferred_element_type=jnp.float32) + shmask  # (N, 384)

    # one GELU over the whole slab, lane-wise gate multiply, stacked down-proj
    h1 = _gelu(pre)
    ffn = jnp.dot(h1 * gate_full, w2s_ref[...], preferred_element_type=jnp.float32)  # (N, D)

    # gate-weighted routed down-proj biases + shared down-proj bias (exact semantics)
    be2 = slab_ref[ROW_BE2:ROW_BE2 + NUM_EXPERTS, :HIDDEN]    # (E, D)
    bs2 = slab_ref[ROW_BS2:ROW_BS2 + 1, :HIDDEN]              # (1, D)
    down_bias = jnp.dot(gate, be2, preferred_element_type=jnp.float32) + bs2       # (N, D)

    y = x1 + ffn + down_bias                                  # residual (ffn_dropout = id)

    # packed lane-dense output slab: y in lanes [0, D), router logits in [D, D+E)
    # (lanes [D+E, 128) are never read by the wrapper)
    out_ref[:, :HIDDEN] = y
    out_ref[:, HIDDEN:HIDDEN + NUM_EXPERTS] = logits


def _fuse_params(params):
    (ln1_g, ln1_b,
     wq, bq, wk, bk, wv, bv, wo, bo,
     ln2_g, ln2_b,
     wr, br,
     we1, be1, we2, be2,
     ws1, bs1, ws2, bs2) = params

    D = HIDDEN
    scale = 1.0 / math.sqrt(HEAD_DIM)

    # fused QKV weight / bias, 1/sqrt(head_dim) folded into Q, zero-padded to 128 lanes
    wqkv = jnp.concatenate([wq * scale, wk, wv], axis=1)                 # (D, 96)
    wqkv = jnp.pad(wqkv, ((0, 0), (0, QKV_PAD - QKV_W)))                 # (D, 128)
    bqkv = jnp.concatenate([bq * scale, bk, bv], axis=1)                 # (1, 96)
    bqkv = jnp.pad(bqkv, ((0, 0), (0, QKV_PAD - QKV_W)))                 # (1, 128)

    # stacked expert up-proj + shared up-proj + router, padded to 384 lanes
    w1s = jnp.concatenate(
        [we1.transpose(1, 0, 2).reshape(D, NUM_EXPERTS * EXPERT_FFN), ws1, wr], axis=1)  # (D, 324)
    w1s = jnp.pad(w1s, ((0, 0), (0, FFN_PAD - UP_COLS)))                                 # (D, 384)
    b1s = jnp.concatenate([be1.reshape(1, NUM_EXPERTS * EXPERT_FFN), bs1, br], axis=1)   # (1, 324)
    b1s = jnp.pad(b1s, ((0, 0), (0, FFN_PAD - UP_COLS)))                                 # (1, 384)

    # stacked down-proj (routed experts + shared); router/pad rows are zero
    w2s = jnp.concatenate([we2.reshape(NUM_EXPERTS * EXPERT_FFN, D), ws2], axis=0)       # (320, D)
    w2s = jnp.pad(w2s, ((0, FFN_PAD - FFN_TOTAL), (0, 0)))                               # (384, D)

    # constant gate selector: SEL[e, e*F:(e+1)*F] = 1, zero elsewhere
    sel = jnp.repeat(jnp.eye(NUM_EXPERTS, dtype=jnp.float32), EXPERT_FFN, axis=1)        # (E, 256)
    sel = jnp.pad(sel, ((0, 0), (0, FFN_PAD - NUM_EXPERTS * EXPERT_FFN)))                # (E, 384)
    # shared-expert lanes mask (ones over the shared up-proj lanes)
    shmask = jnp.zeros((1, FFN_PAD), jnp.float32)
    shmask = shmask.at[:, FFN_TOTAL - SHARED_FFN:FFN_TOTAL].set(1.0)

    # single small-parameter slab (one DMA instead of ~12)
    def row(v):
        v2 = v.reshape(1, -1)
        return jnp.pad(v2, ((0, 0), (0, FFN_PAD - v2.shape[1])))

    slab = jnp.concatenate(
        [row(ln1_g), row(ln1_b), row(bqkv), row(bo),
         row(ln2_g), row(ln2_b), row(b1s), shmask, row(bs2),
         jnp.pad(be2, ((0, 0), (0, FFN_PAD - D))),            # rows 9..12
         sel],                                                # rows 13..16
        axis=0)                                               # (17, 384)
    slab = jnp.pad(slab, ((0, SLAB_ROWS - slab.shape[0]), (0, 0)))   # (24, 384)

    return wqkv, wo, w1s, w2s, slab


@jax.jit
def sparse_transformer_layer(x, params):
    B, S, D = x.shape
    N = B * S
    wqkv, wo, w1s, w2s, slab = _fuse_params(params)
    xf = x.reshape(N, D)

    vmem = pltpu.MemorySpace.VMEM
    packed = pl.pallas_call(
        sparse_layer_kernel,
        # single invocation: full-array VMEM blocks, no grid (everything is < 1 MiB)
        in_specs=[pl.BlockSpec(memory_space=vmem)] * 6,
        out_specs=pl.BlockSpec(memory_space=vmem),
        out_shape=jax.ShapeDtypeStruct((N, OUT_PAD), jnp.float32),
    )(xf, wqkv, wo, w1s, w2s, slab)

    y = packed[:, :D].reshape(B, S, D)
    router_logits = packed[:, D:D + NUM_EXPERTS].reshape(B, S, NUM_EXPERTS)
    return y, (router_logits,)


def init_params(key):
    ks = jax.random.split(key, 12)
    s = 0.05

    def w(k, shape):
        return (s * jax.random.normal(k, shape)).astype(jnp.float32)

    params = [
        jnp.ones((1, HIDDEN), jnp.float32), jnp.zeros((1, HIDDEN), jnp.float32),     # ln1
        w(ks[0], (HIDDEN, HIDDEN)), jnp.zeros((1, HIDDEN), jnp.float32),             # wq, bq
        w(ks[1], (HIDDEN, HIDDEN)), jnp.zeros((1, HIDDEN), jnp.float32),             # wk, bk
        w(ks[2], (HIDDEN, HIDDEN)), jnp.zeros((1, HIDDEN), jnp.float32),             # wv, bv
        w(ks[3], (HIDDEN, HIDDEN)), jnp.zeros((1, HIDDEN), jnp.float32),             # wo, bo
        jnp.ones((1, HIDDEN), jnp.float32), jnp.zeros((1, HIDDEN), jnp.float32),     # ln2
        w(ks[4], (HIDDEN, NUM_EXPERTS)), jnp.zeros((1, NUM_EXPERTS), jnp.float32),   # router
        w(ks[5], (NUM_EXPERTS, HIDDEN, EXPERT_FFN)),
        jnp.zeros((NUM_EXPERTS, EXPERT_FFN), jnp.float32),                           # expert up
        w(ks[6], (NUM_EXPERTS, EXPERT_FFN, HIDDEN)),
        jnp.zeros((NUM_EXPERTS, HIDDEN), jnp.float32),                               # expert down
        w(ks[7], (HIDDEN, SHARED_FFN)), jnp.zeros((1, SHARED_FFN), jnp.float32),     # shared up
        w(ks[8], (SHARED_FFN, HIDDEN)), jnp.zeros((1, HIDDEN), jnp.float32),         # shared down
    ]
    return params


if __name__ == "__main__":
    key = jax.random.PRNGKey(0)
    kx, kp = jax.random.split(key)
    x = jax.random.normal(kx, (BATCH, SEQ, HIDDEN), dtype=jnp.float32)
    params = init_params(kp)

    y, router_tuple = sparse_transformer_layer(x, params)
    jax.block_until_ready(y)
    jax.block_until_ready(router_tuple[0])

    assert y.shape == (BATCH, SEQ, HIDDEN)
    assert router_tuple[0].shape == (BATCH, SEQ, NUM_EXPERTS)
    assert bool(jnp.all(jnp.isfinite(y)))
    assert bool(jnp.all(jnp.isfinite(router_tuple[0])))
    print("KERNEL_OK")
</pallas_src>

<mosaic_0001>
module attributes {stable_mosaic.version = 11 : i64} {
  func.func @sparse_layer_kernel(%arg0: memref<16x32xf32, #tpu.memory_space<vmem>>, %arg1: memref<32x128xf32, #tpu.memory_space<vmem>>, %arg2: memref<32x32xf32, #tpu.memory_space<vmem>>, %arg3: memref<32x384xf32, #tpu.memory_space<vmem>>, %arg4: memref<384x32xf32, #tpu.memory_space<vmem>>, %arg5: memref<24x384xf32, #tpu.memory_space<vmem>>, %arg6: memref<16x128xf32, #tpu.memory_space<vmem>>) attributes {dimension_semantics = [], scalar_prefetch = 0 : i64, scratch_operands = 0 : i64, tpu.core_type = #tpu.core_type<tc>} {
    %c0 = arith.constant 0 : index
    %c0_0 = arith.constant 0 : index
    %0 = vector.load %arg0[%c0, %c0_0] : memref<16x32xf32, #tpu.memory_space<vmem>>, vector<16x32xf32>
    %c0_1 = arith.constant 0 : index
    %c0_2 = arith.constant 0 : index
    %1 = vector.load %arg5[%c0_1, %c0_2] : memref<24x384xf32, #tpu.memory_space<vmem>>, vector<1x32xf32>
    %c1 = arith.constant 1 : index
    %c0_3 = arith.constant 0 : index
    %2 = vector.load %arg5[%c1, %c0_3] : memref<24x384xf32, #tpu.memory_space<vmem>>, vector<1x32xf32>
    %cst = arith.constant dense<0.000000e+00> : vector<16xf32>
    %3 = vector.multi_reduction <add>, %0, %cst [1] : vector<16x32xf32> to vector<16xf32>
    %4 = vector.shape_cast %3 : vector<16xf32> to vector<16x1xf32>
    %cst_4 = arith.constant 3.200000e+01 : f32
    %5 = vector.broadcast %cst_4 : f32 to vector<16x1xf32>
    %6 = arith.divf %4, %5 : vector<16x1xf32>
    %7 = vector.broadcast %6 : vector<16x1xf32> to vector<16x32xf32>
    %8 = arith.subf %0, %7 : vector<16x32xf32>
    %9 = arith.mulf %8, %8 : vector<16x32xf32>
    %cst_5 = arith.constant dense<0.000000e+00> : vector<16xf32>
    %10 = vector.multi_reduction <add>, %9, %cst_5 [1] : vector<16x32xf32> to vector<16xf32>
    %11 = vector.shape_cast %10 : vector<16xf32> to vector<16x1xf32>
    %cst_6 = arith.constant 3.200000e+01 : f32
    %12 = vector.broadcast %cst_6 : f32 to vector<16x1xf32>
    %13 = arith.divf %11, %12 : vector<16x1xf32>
    %14 = vector.broadcast %6 : vector<16x1xf32> to vector<16x32xf32>
    %15 = arith.subf %0, %14 : vector<16x32xf32>
    %cst_7 = arith.constant 9.99999974E-6 : f32
    %16 = vector.broadcast %cst_7 : f32 to vector<16x1xf32>
    %17 = arith.addf %13, %16 : vector<16x1xf32>
    %18 = math.rsqrt %17 : vector<16x1xf32>
    %19 = vector.broadcast %18 : vector<16x1xf32> to vector<16x32xf32>
    %20 = arith.mulf %15, %19 : vector<16x32xf32>
    %21 = vector.broadcast %1 : vector<1x32xf32> to vector<16x32xf32>
    %22 = arith.mulf %20, %21 : vector<16x32xf32>
    %23 = vector.broadcast %2 : vector<1x32xf32> to vector<16x32xf32>
    %24 = arith.addf %22, %23 : vector<16x32xf32>
    %c2 = arith.constant 2 : index
    %c0_8 = arith.constant 0 : index
    %25 = vector.load %arg5[%c2, %c0_8] : memref<24x384xf32, #tpu.memory_space<vmem>>, vector<1x128xf32>
    %c0_9 = arith.constant 0 : index
    %c0_10 = arith.constant 0 : index
    %26 = vector.load %arg1[%c0_9, %c0_10] : memref<32x128xf32, #tpu.memory_space<vmem>>, vector<32x128xf32>
    %cst_11 = arith.constant dense<0.000000e+00> : vector<16x128xf32>
    %27 = tpu.matmul %24, %26, %cst_11 {dimension_numbers = #tpu.dot_dimension_numbers<[1], [0], [0], [1], [0, 0, 1, 1], [], []>} : vector<16x32xf32>, vector<32x128xf32>, vector<16x128xf32> -> vector<16x128xf32>
    %28 = vector.broadcast %25 : vector<1x128xf32> to vector<16x128xf32>
    %29 = arith.addf %27, %28 : vector<16x128xf32>
    %30 = vector.shape_cast %29 : vector<16x128xf32> to vector<2x8x128xf32>
    %31 = vector.extract_strided_slice %30 {offsets = [0, 0, 0], sizes = [2, 8, 8], strides = [1, 1, 1]} : vector<2x8x128xf32> to vector<2x8x8xf32>
    %32 = vector.extract_strided_slice %30 {offsets = [0, 0, 32], sizes = [2, 8, 8], strides = [1, 1, 1]} : vector<2x8x128xf32> to vector<2x8x8xf32>
    "tpu.trace_start"() <{level = 10 : i32, message = "bqd,bkd->bqk"}> : () -> ()
    %cst_12 = arith.constant dense<0.000000e+00> : vector<2x8x8xf32>
    %33 = tpu.matmul %31, %32, %cst_12 {dimension_numbers = #tpu.dot_dimension_numbers<[2], [2], [1], [1], [0, 0, 0, 1, 1, 1], [0], [0]>} : vector<2x8x8xf32>, vector<2x8x8xf32>, vector<2x8x8xf32> -> vector<2x8x8xf32>
    "tpu.trace_stop"() : () -> ()
    %34 = vector.extract_strided_slice %30 {offsets = [0, 0, 8], sizes = [2, 8, 8], strides = [1, 1, 1]} : vector<2x8x128xf32> to vector<2x8x8xf32>
    %35 = vector.extract_strided_slice %30 {offsets = [0, 0, 40], sizes = [2, 8, 8], strides = [1, 1, 1]} : vector<2x8x128xf32> to vector<2x8x8xf32>
    "tpu.trace_start"() <{level = 10 : i32, message = "bqd,bkd->bqk"}> : () -> ()
    %cst_13 = arith.constant dense<0.000000e+00> : vector<2x8x8xf32>
    %36 = tpu.matmul %34, %35, %cst_13 {dimension_numbers = #tpu.dot_dimension_numbers<[2], [2], [1], [1], [0, 0, 0, 1, 1, 1], [0], [0]>} : vector<2x8x8xf32>, vector<2x8x8xf32>, vector<2x8x8xf32> -> vector<2x8x8xf32>
    "tpu.trace_stop"() : () -> ()
    %37 = vector.extract_strided_slice %30 {offsets = [0, 0, 16], sizes = [2, 8, 8], strides = [1, 1, 1]} : vector<2x8x128xf32> to vector<2x8x8xf32>
    %38 = vector.extract_strided_slice %30 {offsets = [0, 0, 48], sizes = [2, 8, 8], strides = [1, 1, 1]} : vector<2x8x128xf32> to vector<2x8x8xf32>
    "tpu.trace_start"() <{level = 10 : i32, message = "bqd,bkd->bqk"}> : () -> ()
    %cst_14 = arith.constant dense<0.000000e+00> : vector<2x8x8xf32>
    %39 = tpu.matmul %37, %38, %cst_14 {dimension_numbers = #tpu.dot_dimension_numbers<[2], [2], [1], [1], [0, 0, 0, 1, 1, 1], [0], [0]>} : vector<2x8x8xf32>, vector<2x8x8xf32>, vector<2x8x8xf32> -> vector<2x8x8xf32>
    "tpu.trace_stop"() : () -> ()
    %40 = vector.extract_strided_slice %30 {offsets = [0, 0, 24], sizes = [2, 8, 8], strides = [1, 1, 1]} : vector<2x8x128xf32> to vector<2x8x8xf32>
    %41 = vector.extract_strided_slice %30 {offsets = [0, 0, 56], sizes = [2, 8, 8], strides = [1, 1, 1]} : vector<2x8x128xf32> to vector<2x8x8xf32>
    "tpu.trace_start"() <{level = 10 : i32, message = "bqd,bkd->bqk"}> : () -> ()
    %cst_15 = arith.constant dense<0.000000e+00> : vector<2x8x8xf32>
    %42 = tpu.matmul %40, %41, %cst_15 {dimension_numbers = #tpu.dot_dimension_numbers<[2], [2], [1], [1], [0, 0, 0, 1, 1, 1], [0], [0]>} : vector<2x8x8xf32>, vector<2x8x8xf32>, vector<2x8x8xf32> -> vector<2x8x8xf32>
    "tpu.trace_stop"() : () -> ()
    %43 = tpu.concatenate %33, %36, %39, %42 in 0 : vector<2x8x8xf32>, vector<2x8x8xf32>, vector<2x8x8xf32>, vector<2x8x8xf32> -> vector<8x8x8xf32>
    %cst_16 = arith.constant dense<0xFF800000> : vector<8x8xf32>
    %44 = vector.multi_reduction <maximumf>, %43, %cst_16 [2] : vector<8x8x8xf32> to vector<8x8xf32>
    %45 = vector.shape_cast %44 : vector<8x8xf32> to vector<8x8x1xf32>
    %46 = vector.broadcast %45 : vector<8x8x1xf32> to vector<8x8x8xf32>
    %47 = arith.subf %43, %46 : vector<8x8x8xf32>
    %48 = math.exp %47 : vector<8x8x8xf32>
    %cst_17 = arith.constant dense<0.000000e+00> : vector<8x8xf32>
    %49 = vector.multi_reduction <add>, %48, %cst_17 [2] : vector<8x8x8xf32> to vector<8x8xf32>
    %50 = vector.shape_cast %49 : vector<8x8xf32> to vector<8x8x1xf32>
    %51 = tpu.reciprocal %50 {approx = true} : vector<8x8x1xf32> -> vector<8x8x1xf32>
    %52 = vector.broadcast %51 : vector<8x8x1xf32> to vector<8x8x8xf32>
    %53 = arith.mulf %48, %52 : vector<8x8x8xf32>
    %54 = vector.extract_strided_slice %30 {offsets = [0, 0, 64], sizes = [2, 8, 8], strides = [1, 1, 1]} : vector<2x8x128xf32> to vector<2x8x8xf32>
    %55 = vector.extract_strided_slice %53 {offsets = [0, 0, 0], sizes = [2, 8, 8], strides = [1, 1, 1]} : vector<8x8x8xf32> to vector<2x8x8xf32>
    "tpu.trace_start"() <{level = 10 : i32, message = "bqk,bkd->bqd"}> : () -> ()
    %cst_18 = arith.constant dense<0.000000e+00> : vector<2x8x8xf32>
    %56 = tpu.matmul %55, %54, %cst_18 {dimension_numbers = #tpu.dot_dimension_numbers<[2], [1], [1], [2], [0, 0, 0, 1, 1, 2], [0], [0]>} : vector<2x8x8xf32>, vector<2x8x8xf32>, vector<2x8x8xf32> -> vector<2x8x8xf32>
    "tpu.trace_stop"() : () -> ()
    %57 = vector.extract_strided_slice %30 {offsets = [0, 0, 72], sizes = [2, 8, 8], strides = [1, 1, 1]} : vector<2x8x128xf32> to vector<2x8x8xf32>
    %58 = vector.extract_strided_slice %53 {offsets = [2, 0, 0], sizes = [2, 8, 8], strides = [1, 1, 1]} : vector<8x8x8xf32> to vector<2x8x8xf32>
    "tpu.trace_start"() <{level = 10 : i32, message = "bqk,bkd->bqd"}> : () -> ()
    %cst_19 = arith.constant dense<0.000000e+00> : vector<2x8x8xf32>
    %59 = tpu.matmul %58, %57, %cst_19 {dimension_numbers = #tpu.dot_dimension_numbers<[2], [1], [1], [2], [0, 0, 0, 1, 1, 2], [0], [0]>} : vector<2x8x8xf32>, vector<2x8x8xf32>, vector<2x8x8xf32> -> vector<2x8x8xf32>
    "tpu.trace_stop"() : () -> ()
    %60 = vector.extract_strided_slice %30 {offsets = [0, 0, 80], sizes = [2, 8, 8], strides = [1, 1, 1]} : vector<2x8x128xf32> to vector<2x8x8xf32>
    %61 = vector.extract_strided_slice %53 {offsets = [4, 0, 0], sizes = [2, 8, 8], strides = [1, 1, 1]} : vector<8x8x8xf32> to vector<2x8x8xf32>
    "tpu.trace_start"() <{level = 10 : i32, message = "bqk,bkd->bqd"}> : () -> ()
    %cst_20 = arith.constant dense<0.000000e+00> : vector<2x8x8xf32>
    %62 = tpu.matmul %61, %60, %cst_20 {dimension_numbers = #tpu.dot_dimension_numbers<[2], [1], [1], [2], [0, 0, 0, 1, 1, 2], [0], [0]>} : vector<2x8x8xf32>, vector<2x8x8xf32>, vector<2x8x8xf32> -> vector<2x8x8xf32>
    "tpu.trace_stop"() : () -> ()
    %63 = vector.extract_strided_slice %30 {offsets = [0, 0, 88], sizes = [2, 8, 8], strides = [1, 1, 1]} : vector<2x8x128xf32> to vector<2x8x8xf32>
    %64 = vector.extract_strided_slice %53 {offsets = [6, 0, 0], sizes = [2, 8, 8], strides = [1, 1, 1]} : vector<8x8x8xf32> to vector<2x8x8xf32>
    "tpu.trace_start"() <{level = 10 : i32, message = "bqk,bkd->bqd"}> : () -> ()
    %cst_21 = arith.constant dense<0.000000e+00> : vector<2x8x8xf32>
    %65 = tpu.matmul %64, %63, %cst_21 {dimension_numbers = #tpu.dot_dimension_numbers<[2], [1], [1], [2], [0, 0, 0, 1, 1, 2], [0], [0]>} : vector<2x8x8xf32>, vector<2x8x8xf32>, vector<2x8x8xf32> -> vector<2x8x8xf32>
    "tpu.trace_stop"() : () -> ()
    %66 = tpu.concatenate %56, %59, %62, %65 in 2 : vector<2x8x8xf32>, vector<2x8x8xf32>, vector<2x8x8xf32>, vector<2x8x8xf32> -> vector<2x8x32xf32>
    %67 = vector.shape_cast %66 : vector<2x8x32xf32> to vector<16x32xf32>
    %c3 = arith.constant 3 : index
    %c0_22 = arith.constant 0 : index
    %68 = vector.load %arg5[%c3, %c0_22] : memref<24x384xf32, #tpu.memory_space<vmem>>, vector<1x32xf32>
    %c0_23 = arith.constant 0 : index
    %c0_24 = arith.constant 0 : index
    %69 = vector.load %arg2[%c0_23, %c0_24] : memref<32x32xf32, #tpu.memory_space<vmem>>, vector<32x32xf32>
    %cst_25 = arith.constant dense<0.000000e+00> : vector<16x32xf32>
    %70 = tpu.matmul %67, %69, %cst_25 {dimension_numbers = #tpu.dot_dimension_numbers<[1], [0], [0], [1], [0, 0, 1, 1], [], []>} : vector<16x32xf32>, vector<32x32xf32>, vector<16x32xf32> -> vector<16x32xf32>
    %71 = vector.broadcast %68 : vector<1x32xf32> to vector<16x32xf32>
    %72 = arith.addf %70, %71 : vector<16x32xf32>
    %73 = arith.addf %0, %72 : vector<16x32xf32>
    %c4 = arith.constant 4 : index
    %c0_26 = arith.constant 0 : index
    %74 = vector.load %arg5[%c4, %c0_26] : memref<24x384xf32, #tpu.memory_space<vmem>>, vector<1x32xf32>
    %c5 = arith.constant 5 : index
    %c0_27 = arith.constant 0 : index
    %75 = vector.load %arg5[%c5, %c0_27] : memref<24x384xf32, #tpu.memory_space<vmem>>, vector<1x32xf32>
    %cst_28 = arith.constant dense<0.000000e+00> : vector<16xf32>
    %76 = vector.multi_reduction <add>, %73, %cst_28 [1] : vector<16x32xf32> to vector<16xf32>
    %77 = vector.shape_cast %76 : vector<16xf32> to vector<16x1xf32>
    %cst_29 = arith.constant 3.200000e+01 : f32
    %78 = vector.broadcast %cst_29 : f32 to vector<16x1xf32>
    %79 = arith.divf %77, %78 : vector<16x1xf32>
    %80 = vector.broadcast %79 : vector<16x1xf32> to vector<16x32xf32>
    %81 = arith.subf %73, %80 : vector<16x32xf32>
    %82 = arith.mulf %81, %81 : vector<16x32xf32>
    %cst_30 = arith.constant dense<0.000000e+00> : vector<16xf32>
    %83 = vector.multi_reduction <add>, %82, %cst_30 [1] : vector<16x32xf32> to vector<16xf32>
    %84 = vector.shape_cast %83 : vector<16xf32> to vector<16x1xf32>
    %cst_31 = arith.constant 3.200000e+01 : f32
    %85 = vector.broadcast %cst_31 : f32 to vector<16x1xf32>
    %86 = arith.divf %84, %85 : vector<16x1xf32>
    %87 = vector.broadcast %79 : vector<16x1xf32> to vector<16x32xf32>
    %88 = arith.subf %73, %87 : vector<16x32xf32>
    %cst_32 = arith.constant 9.99999974E-6 : f32
    %89 = vector.broadcast %cst_32 : f32 to vector<16x1xf32>
    %90 = arith.addf %86, %89 : vector<16x1xf32>
    %91 = math.rsqrt %90 : vector<16x1xf32>
    %92 = vector.broadcast %91 : vector<16x1xf32> to vector<16x32xf32>
    %93 = arith.mulf %88, %92 : vector<16x32xf32>
    %94 = vector.broadcast %74 : vector<1x32xf32> to vector<16x32xf32>
    %95 = arith.mulf %93, %94 : vector<16x32xf32>
    %96 = vector.broadcast %75 : vector<1x32xf32> to vector<16x32xf32>
    %97 = arith.addf %95, %96 : vector<16x32xf32>
    %c6 = arith.constant 6 : index
    %c0_33 = arith.constant 0 : index
    %98 = vector.load %arg5[%c6, %c0_33] : memref<24x384xf32, #tpu.memory_space<vmem>>, vector<1x384xf32>
    %c0_34 = arith.constant 0 : index
    %c0_35 = arith.constant 0 : index
    %99 = vector.load %arg3[%c0_34, %c0_35] : memref<32x384xf32, #tpu.memory_space<vmem>>, vector<32x384xf32>
    %cst_36 = arith.constant dense<0.000000e+00> : vector<16x384xf32>
    %100 = tpu.matmul %97, %99, %cst_36 {dimension_numbers = #tpu.dot_dimension_numbers<[1], [0], [0], [1], [0, 0, 1, 1], [], []>} : vector<16x32xf32>, vector<32x384xf32>, vector<16x384xf32> -> vector<16x384xf32>
    %101 = vector.broadcast %98 : vector<1x384xf32> to vector<16x384xf32>
    %102 = arith.addf %100, %101 : vector<16x384xf32>
    %103 = vector.extract_strided_slice %102 {offsets = [0, 320], sizes = [16, 4], strides = [1, 1]} : vector<16x384xf32> to vector<16x4xf32>
    %cst_37 = arith.constant dense<0xFF800000> : vector<16xf32>
    %104 = vector.multi_reduction <maximumf>, %103, %cst_37 [1] : vector<16x4xf32> to vector<16xf32>
    %105 = vector.shape_cast %104 : vector<16xf32> to vector<16x1xf32>
    %106 = vector.broadcast %105 : vector<16x1xf32> to vector<16x4xf32>
    %107 = arith.subf %103, %106 : vector<16x4xf32>
    %108 = math.exp %107 : vector<16x4xf32>
    %cst_38 = arith.constant dense<0.000000e+00> : vector<16xf32>
    %109 = vector.multi_reduction <add>, %108, %cst_38 [1] : vector<16x4xf32> to vector<16xf32>
    %110 = vector.shape_cast %109 : vector<16xf32> to vector<16x1xf32>
    %111 = tpu.reciprocal %110 {approx = true} : vector<16x1xf32> -> vector<16x1xf32>
    %112 = vector.broadcast %111 : vector<16x1xf32> to vector<16x4xf32>
    %113 = arith.mulf %108, %112 : vector<16x4xf32>
    %114 = tpu.iota {dimensions = array<i32: 1>} : vector<16x4xi32>
    %cst_39 = arith.constant 0.000000e+00 : f32
    %115 = vector.broadcast %cst_39 : f32 to vector<16x4xf32>
    %cst_40 = arith.constant dense<0xFF800000> : vector<16xf32>
    %116 = vector.multi_reduction <maximumf>, %113, %cst_40 [1] : vector<16x4xf32> to vector<16xf32>
    %117 = vector.shape_cast %116 : vector<16xf32> to vector<16x1xf32>
    %118 = vector.broadcast %117 : vector<16x1xf32> to vector<16x4xf32>
    %119 = arith.cmpf oeq, %113, %118 : vector<16x4xf32>
    %c4_i32 = arith.constant 4 : i32
    %120 = vector.broadcast %c4_i32 : i32 to vector<16x4xi32>
    %121 = arith.select %119, %114, %120 : vector<16x4xi1>, vector<16x4xi32>
    %cst_41 = arith.constant dense<2147483647> : vector<16xi32>
    %122 = vector.multi_reduction <minsi>, %121, %cst_41 [1] : vector<16x4xi32> to vector<16xi32>
    %123 = vector.shape_cast %122 : vector<16xi32> to vector<16x1xi32>
    %124 = vector.broadcast %123 : vector<16x1xi32> to vector<16x4xi32>
    %125 = arith.cmpi eq, %114, %124 : vector<16x4xi32>
    %126 = arith.select %125, %113, %115 : vector<16x4xi1>, vector<16x4xf32>
    %cst_42 = arith.constant 0xFF800000 : f32
    %127 = vector.broadcast %cst_42 : f32 to vector<16x4xf32>
    %128 = arith.select %125, %127, %113 : vector<16x4xi1>, vector<16x4xf32>
    %cst_43 = arith.constant dense<0xFF800000> : vector<16xf32>
    %129 = vector.multi_reduction <maximumf>, %128, %cst_43 [1] : vector<16x4xf32> to vector<16xf32>
    %130 = vector.shape_cast %129 : vector<16xf32> to vector<16x1xf32>
    %131 = vector.broadcast %130 : vector<16x1xf32> to vector<16x4xf32>
    %132 = arith.cmpf oeq, %128, %131 : vector<16x4xf32>
    %c4_i32_44 = arith.constant 4 : i32
    %133 = vector.broadcast %c4_i32_44 : i32 to vector<16x4xi32>
    %134 = arith.select %132, %114, %133 : vector<16x4xi1>, vector<16x4xi32>
    %cst_45 = arith.constant dense<2147483647> : vector<16xi32>
    %135 = vector.multi_reduction <minsi>, %134, %cst_45 [1] : vector<16x4xi32> to vector<16xi32>
    %136 = vector.shape_cast %135 : vector<16xi32> to vector<16x1xi32>
    %137 = vector.broadcast %136 : vector<16x1xi32> to vector<16x4xi32>
    %138 = arith.cmpi eq, %114, %137 : vector<16x4xi32>
    %139 = arith.select %138, %113, %126 : vector<16x4xi1>, vector<16x4xf32>
    %cst_46 = arith.constant dense<0.000000e+00> : vector<16xf32>
    %140 = vector.multi_reduction <add>, %139, %cst_46 [1] : vector<16x4xf32> to vector<16xf32>
    %141 = vector.shape_cast %140 : vector<16xf32> to vector<16x1xf32>
    %142 = tpu.reciprocal %141 {approx = true} : vector<16x1xf32> -> vector<16x1xf32>
    %143 = vector.broadcast %142 : vector<16x1xf32> to vector<16x4xf32>
    %144 = arith.mulf %139, %143 : vector<16x4xf32>
    %c13 = arith.constant 13 : index
    %c0_47 = arith.constant 0 : index
    %145 = vector.load %arg5[%c13, %c0_47] : memref<24x384xf32, #tpu.memory_space<vmem>>, vector<4x384xf32>
    %c7 = arith.constant 7 : index
    %c0_48 = arith.constant 0 : index
    %146 = vector.load %arg5[%c7, %c0_48] : memref<24x384xf32, #tpu.memory_space<vmem>>, vector<1x384xf32>
    %cst_49 = arith.constant dense<0.000000e+00> : vector<16x384xf32>
    %147 = tpu.matmul %144, %145, %cst_49 {dimension_numbers = #tpu.dot_dimension_numbers<[1], [0], [0], [1], [0, 0, 1, 1], [], []>} : vector<16x4xf32>, vector<4x384xf32>, vector<16x384xf32> -> vector<16x384xf32>
    %148 = vector.broadcast %146 : vector<1x384xf32> to vector<16x384xf32>
    %149 = arith.addf %147, %148 : vector<16x384xf32>
    %cst_50 = arith.constant 5.000000e-01 : f32
    %150 = vector.broadcast %cst_50 : f32 to vector<16x384xf32>
    %151 = arith.mulf %150, %102 : vector<16x384xf32>
    %cst_51 = arith.constant 4.471500e-02 : f32
    %152 = vector.broadcast %cst_51 : f32 to vector<16x384xf32>
    %153 = arith.mulf %152, %102 : vector<16x384xf32>
    %154 = arith.mulf %153, %102 : vector<16x384xf32>
    %155 = arith.mulf %154, %102 : vector<16x384xf32>
    %156 = arith.addf %102, %155 : vector<16x384xf32>
    %cst_52 = arith.constant 0.797884583 : f32
    %157 = vector.broadcast %cst_52 : f32 to vector<16x384xf32>
    %158 = arith.mulf %157, %156 : vector<16x384xf32>
    %159 = math.tanh %158 : vector<16x384xf32>
    %cst_53 = arith.constant 1.000000e+00 : f32
    %160 = vector.broadcast %cst_53 : f32 to vector<16x384xf32>
    %161 = arith.addf %160, %159 : vector<16x384xf32>
    %162 = arith.mulf %151, %161 : vector<16x384xf32>
    %163 = arith.mulf %162, %149 : vector<16x384xf32>
    %c0_54 = arith.constant 0 : index
    %c0_55 = arith.constant 0 : index
    %164 = vector.load %arg4[%c0_54, %c0_55] : memref<384x32xf32, #tpu.memory_space<vmem>>, vector<384x32xf32>
    %cst_56 = arith.constant dense<0.000000e+00> : vector<16x32xf32>
    %165 = tpu.matmul %163, %164, %cst_56 {dimension_numbers = #tpu.dot_dimension_numbers<[1], [0], [0], [1], [0, 0, 1, 1], [], []>} : vector<16x384xf32>, vector<384x32xf32>, vector<16x32xf32> -> vector<16x32xf32>
    %c9 = arith.constant 9 : index
    %c0_57 = arith.constant 0 : index
    %166 = vector.load %arg5[%c9, %c0_57] : memref<24x384xf32, #tpu.memory_space<vmem>>, vector<4x32xf32>
    %c8 = arith.constant 8 : index
    %c0_58 = arith.constant 0 : index
    %167 = vector.load %arg5[%c8, %c0_58] : memref<24x384xf32, #tpu.memory_space<vmem>>, vector<1x32xf32>
    %cst_59 = arith.constant dense<0.000000e+00> : vector<16x32xf32>
    %168 = tpu.matmul %144, %166, %cst_59 {dimension_numbers = #tpu.dot_dimension_numbers<[1], [0], [0], [1], [0, 0, 1, 1], [], []>} : vector<16x4xf32>, vector<4x32xf32>, vector<16x32xf32> -> vector<16x32xf32>
    %169 = vector.broadcast %167 : vector<1x32xf32> to vector<16x32xf32>
    %170 = arith.addf %168, %169 : vector<16x32xf32>
    %171 = arith.addf %73, %165 : vector<16x32xf32>
    %172 = arith.addf %171, %170 : vector<16x32xf32>
    %c0_60 = arith.constant 0 : index
    %c0_61 = arith.constant 0 : index
    %173 = vector.load %arg6[%c0_60, %c0_61] : memref<16x128xf32, #tpu.memory_space<vmem>>, vector<16x32xf32>
    tpu.vector_store %arg6[%c0_60, %c0_61], %172 {strides = array<i32>} : memref<16x128xf32, #tpu.memory_space<vmem>>, vector<16x32xf32>,
    %c0_62 = arith.constant 0 : index
    %c32 = arith.constant 32 : index
    %174 = vector.load %arg6[%c0_62, %c32] : memref<16x128xf32, #tpu.memory_space<vmem>>, vector<16x4xf32>
    tpu.vector_store %arg6[%c0_62, %c32], %103 {strides = array<i32>} : memref<16x128xf32, #tpu.memory_space<vmem>>, vector<16x4xf32>,
    return
  }
}

</mosaic_0001>

<llo_original>
// kernel: sparse_transformer_layer.1
$region0: #{sparse_transformer_layer.1}
  #allocation0 [shape = 'u32[]', space=smem, size = 0x4, offset = 0x4, fixed_abs, tag = 'smem constant byte address 0x4 - core index']
  #allocation1 [shape = 'u32[144,128]{1,0:T(1,128)}', space=vmem, size = 0x12000, scoped, tag = 'internal scratch']
  %s0 = inlined_call_operand.vmem [shape: f32[16,32], index: 0, kind: input, shape index: {}]
  %s1 = inlined_call_operand.vmem [shape: f32[32,128], index: 1, kind: input, shape index: {}]
  %s2 = inlined_call_operand.vmem [shape: f32[32,32], index: 2, kind: input, shape index: {}]
  %s3 = inlined_call_operand.vmem [shape: f32[32,384], index: 3, kind: input, shape index: {}]
  %s4 = inlined_call_operand.vmem [shape: f32[384,32], index: 4, kind: input, shape index: {}]
  %s5 = inlined_call_operand.vmem [shape: f32[24,384], index: 5, kind: input, shape index: {}]
  %s6 = inlined_call_operand.vmem [shape: f32[16,128], index: 6, kind: output, shape index: {}]
  %s7 = sld [smem:[#allocation0]]
  $region34: #{sparse_transformer_layer.1} parent=0
    _
  %s9 = ssub.s32 1, %s7
  %s10 = scalar_select 0, %s9, %s7
  // Predicated region
  $region2: #{sparse_transformer_layer.1} parent=0 // pred_check
    _
  $region3: #{sparse_transformer_layer.1} parent=0 // pred_check_branch
    %12 = sbr.rel (0) target = $region5
  $region4: #{sparse_transformer_layer.1} parent=0 // pred_region
    _
  $region5: #{sparse_transformer_layer.1} parent=0 // pred_fallthru
    _
  // Predicated region
  $region6: #{sparse_transformer_layer.1} parent=0 // pred_check
    _
  $region7: #{sparse_transformer_layer.1} parent=0 // pred_check_branch
    %14 = sbr.rel (0) target = $region9
  $region8: #{sparse_transformer_layer.1} parent=0 // pred_region
    _
  $region9: #{sparse_transformer_layer.1} parent=0 // pred_fallthru
    _
  // Predicated region
  $region10: #{sparse_transformer_layer.1} parent=0 // pred_check
    _
  $region11: #{sparse_transformer_layer.1} parent=0 // pred_check_branch
    %16 = sbr.rel (0) target = $region13
  $region12: #{sparse_transformer_layer.1} parent=0 // pred_region
    _
  $region13: #{sparse_transformer_layer.1} parent=0 // pred_fallthru
    _
  // Predicated region
  $region14: #{sparse_transformer_layer.1} parent=0 // pred_check
    _
  $region15: #{sparse_transformer_layer.1} parent=0 // pred_check_branch
    %18 = sbr.rel (0) target = $region17
  $region16: #{sparse_transformer_layer.1} parent=0 // pred_region
    _
  $region17: #{sparse_transformer_layer.1} parent=0 // pred_fallthru
    _
  // Predicated region
  $region18: #{sparse_transformer_layer.1} parent=0 // pred_check
    _
  $region19: #{sparse_transformer_layer.1} parent=0 // pred_check_branch
    %20 = sbr.rel (0) target = $region21
  $region20: #{sparse_transformer_layer.1} parent=0 // pred_region
    _
  $region21: #{sparse_transformer_layer.1} parent=0 // pred_fallthru
    _
  // Predicated region
  $region22: #{sparse_transformer_layer.1} parent=0 // pred_check
    _
  $region23: #{sparse_transformer_layer.1} parent=0 // pred_check_branch
    %22 = sbr.rel (0) target = $region25
  $region24: #{sparse_transformer_layer.1} parent=0 // pred_region
    _
  $region25: #{sparse_transformer_layer.1} parent=0 // pred_fallthru
    _
  %v23 = vld [vmem:[%s0] sm:$0xff]
  %v24 = vld [vmem:[%s0 + $0x8] sm:$0xff]
  %v25 = vld [vmem:[%s5] ss:$0 sm:$0xff]
  %v26 = vld [vmem:[%s5 + $0x1] ss:$0 sm:$0xff]
  %vm27 = vcmask 261120
  %v28 = vsel %vm27, %v23, 0.0
  %29 = vadd.xlane.f32.xlu0 %v28
  %v30 = vpop.xlane.xlu0 %29
  %v31 = vsel %vm27, %v24, 0.0
  %32 = vadd.xlane.f32.xlu0 %v31
  %v33 = vpop.xlane.xlu0 %32
  %v34 = vrcp.pop 32.0
  %v35 = vmul.f32 %v30, %v34
  %v36 = vmul.f32 %v33, %v34
  %v37 = vsub.f32 %v23, %v35
  %v38 = vsub.f32 %v24, %v36
  %v39 = vmul.f32 %v37, %v37
  %v40 = vmul.f32 %v38, %v38
  %v41 = vsel %vm27, %v39, 0.0
  %42 = vadd.xlane.f32.xlu0 %v41
  %v43 = vpop.xlane.xlu0 %42
  %v44 = vsel %vm27, %v40, 0.0
  %45 = vadd.xlane.f32.xlu0 %v44
  %v46 = vpop.xlane.xlu0 %45
  %v47 = vmul.f32 %v43, %v34
  %v48 = vmul.f32 %v46, %v34
  %v49 = vadd.f32 %v47, 1e-05
  %v50 = vadd.f32 %v48, 1e-05
  %v51 = vrsqrt.pop %v49
  %v52 = vrsqrt.pop %v50
  %v53 = vmul.f32 %v37, %v51
  %v54 = vmul.f32 %v38, %v52
  %v55 = vmul.f32 %v53, %v25
  %v56 = vmul.f32 %v54, %v25
  %v57 = vadd.f32 %v55, %v26
  %v58 = vadd.f32 %v56, %v26
  %v59 = vld [vmem:[%s5 + $0x2] ss:$0 sm:$0xff]
  %v60 = vld [vmem:[%s1] sm:$0xff]
  %v61 = vld [vmem:[%s1 + $0x8] sm:$0xff]
  %v62 = vld [vmem:[%s1 + $0x10] sm:$0xff]
  %v63 = vld [vmem:[%s1 + $0x18] sm:$0xff]
  %v65 = vsel %vm27, %v57, 0
  %v68 = vsel %vm27, %v58, 0
  %70 = vmatprep.subr.mxu0 0.0
  %71 = vmatpush1.msra.mxu0 %v60
  %72 = vmatprep.subr.mxu0 0.0
  %73 = vmatpush1.msra.mxu0 %v61
  %74 = vmatprep.subr.mxu0 0.0
  %75 = vmatpush1.msra.mxu0 %v62
  %76 = vmatprep.subr.mxu0 0.0
  %77 = vmatpush1.msra.mxu0 %v63
  %78 = vmatprep.subr.mxu0 0.0
  %79 = vmatpush1.msra.mxu0 0.0
  %80 = vmatprep.subr.mxu0 0.0
  %81 = vmatpush1.msra.mxu0 0.0
  %82 = vmatprep.subr.mxu0 0.0
  %83 = vmatpush1.msra.mxu0 0.0
  %84 = vmatprep.subr.mxu0 0.0
  %85 = vmatpush1.msra.mxu0 0.0
  %86 = vmatprep.subr.mxu0 0.0
  %87 = vmatpush1.msra.mxu0 0.0
  %88 = vmatprep.subr.mxu0 0.0
  %89 = vmatpush1.msra.mxu0 0.0
  %90 = vmatprep.subr.mxu0 0.0
  %91 = vmatpush1.msra.mxu0 0.0
  %92 = vmatprep.subr.mxu0 0.0
  %93 = vmatpush1.msra.mxu0 0.0
  %94 = vmatprep.subr.mxu0 0.0
  %95 = vmatpush1.msra.mxu0 0.0
  %96 = vmatprep.subr.mxu0 0.0
  %97 = vmatpush1.msra.mxu0 0.0
  %98 = vmatprep.subr.mxu0 0.0
  %99 = vmatpush1.msra.mxu0 0.0
  %100 = vmatprep.subr.mxu0 0.0
  %101 = vmatpush1.msra.mxu0 0.0
  %102 = vmatprep.subr.mxu0 0.0
  %103 = vmatpush1.msra.mxu0 0.0
  %104 = vmatprep.subr.mxu0 0.0
  %105 = vmatpush1.msra.mxu0 0.0
  %106 = vmatprep.subr.mxu0 0.0
  %107 = vmatpush1.msra.mxu0 0.0
  %108 = vmatprep.subr.mxu0 0.0
  %109 = vmatpush1.msra.mxu0 0.0
  %110 = vmatprep.subr.mxu0 0.0
  %111 = vmatpush1.msra.mxu0 0.0
  %112 = vmatprep.subr.mxu0 0.0
  %113 = vmatpush1.msra.mxu0 0.0
  %114 = vmatprep.subr.mxu0 0.0
  %115 = vmatpush1.msra.mxu0 0.0
  %116 = vmatprep.subr.mxu0 0.0
  %117 = vmatpush1.msra.mxu0 0.0
  %118 = vmatprep.subr.mxu0 0.0
  %119 = vmatpush1.msra.mxu0 0.0
  %120 = vmatprep.subr.mxu0 0.0
  %121 = vmatpush1.msra.mxu0 0.0
  %122 = vmatprep.subr.mxu0 0.0
  %123 = vmatpush1.msra.mxu0 0.0
  %124 = vmatprep.subr.mxu0 0.0
  %125 = vmatpush1.msra.mxu0 0.0
  %126 = vmatprep.subr.mxu0 0.0
  %127 = vmatpush1.msra.mxu0 0.0
  %128 = vmatprep.subr.mxu0 0.0
  %129 = vmatpush1.msra.mxu0 0.0
  %130 = vmatprep.subr.mxu0 0.0
  %131 = vmatpush1.msra.mxu0 0.0
  %132 = vmatprep.subr.mxu0 0.0
  %133 = vmatpush1.msra.mxu0 0.0
  %134 = vmatprep.mubr.f32.mxu0 0.0
  %135 = vmatmul.mubr.f32.gmra.mrb[0].mxu0 %v65
  %v136 = vpop.f32.mrb[0].mxu0
  %v137 = vadd.f32 %v59, %v136
  %v138 = vpop.f32.mrb[0].mxu0
  %139 = vmatprep.mubr.f32.mxu0 0.0
  %140 = vmatmul.mubr.f32.gmra.mrb[0].mxu0 %v68
  %v141 = vpop.f32.mrb[0].mxu0
  %v142 = vadd.f32 %v59, %v141
  %v143 = vpop.f32.mrb[0].mxu0
  %144 = vdwg.mxu0
  %146 = vrot.lane.b32.xlu0 %v137, 96
  %v147 = vpop.permute.xlu0 %146
  %vm148 = vcmask 64512
  %v149 = vsel %vm148, %v137, 0
  %v151 = vsel %vm148, %v147, 0
  %153 = vmatprep.subr.mxu0 0.0
  %154 = vmatpush1.xpose.msra.mxu0 %v151
  %155 = vmatprep.subr.mxu0 0.0
  %156 = vmatpush1.xpose.msra.mxu0 0.0
  %157 = vmatprep.subr.mxu0 0.0
  %158 = vmatpush1.xpose.msra.mxu0 0.0
  %159 = vmatprep.subr.mxu0 0.0
  %160 = vmatpush1.xpose.msra.mxu0 0.0
  %161 = vmatprep.subr.mxu0 0.0
  %162 = vmatpush1.xpose.msra.mxu0 0.0
  %163 = vmatprep.subr.mxu0 0.0
  %164 = vmatpush1.xpose.msra.mxu0 0.0
  %165 = vmatprep.subr.mxu0 0.0
  %166 = vmatpush1.xpose.msra.mxu0 0.0
  %167 = vmatprep.subr.mxu0 0.0
  %168 = vmatpush1.xpose.msra.mxu0 0.0
  %169 = vmatprep.subr.mxu0 0.0
  %170 = vmatpush1.xpose.msra.mxu0 0.0
  %171 = vmatprep.subr.mxu0 0.0
  %172 = vmatpush1.xpose.msra.mxu0 0.0
  %173 = vmatprep.subr.mxu0 0.0
  %174 = vmatpush1.xpose.msra.mxu0 0.0
  %175 = vmatprep.subr.mxu0 0.0
  %176 = vmatpush1.xpose.msra.mxu0 0.0
  %177 = vmatprep.subr.mxu0 0.0
  %178 = vmatpush1.xpose.msra.mxu0 0.0
  %179 = vmatprep.subr.mxu0 0.0
  %180 = vmatpush1.xpose.msra.mxu0 0.0
  %181 = vmatprep.subr.mxu0 0.0
  %182 = vmatpush1.xpose.msra.mxu0 0.0
  %183 = vmatprep.subr.mxu0 0.0
  %184 = vmatpush1.xpose.msra.mxu0 0.0
  %185 = vmatprep.subr.mxu0 0.0
  %186 = vmatpush1.xpose.msra.mxu0 0.0
  %187 = vmatprep.subr.mxu0 0.0
  %188 = vmatpush1.xpose.msra.mxu0 0.0
  %189 = vmatprep.subr.mxu0 0.0
  %190 = vmatpush1.xpose.msra.mxu0 0.0
  %191 = vmatprep.subr.mxu0 0.0
  %192 = vmatpush1.xpose.msra.mxu0 0.0
  %193 = vmatprep.subr.mxu0 0.0
  %194 = vmatpush1.xpose.msra.mxu0 0.0
  %195 = vmatprep.subr.mxu0 0.0
  %196 = vmatpush1.xpose.msra.mxu0 0.0
  %197 = vmatprep.subr.mxu0 0.0
  %198 = vmatpush1.xpose.msra.mxu0 0.0
  %199 = vmatprep.subr.mxu0 0.0
  %200 = vmatpush1.xpose.msra.mxu0 0.0
  %201 = vmatprep.subr.mxu0 0.0
  %202 = vmatpush1.xpose.msra.mxu0 0.0
  %203 = vmatprep.subr.mxu0 0.0
  %204 = vmatpush1.xpose.msra.mxu0 0.0
  %205 = vmatprep.subr.mxu0 0.0
  %206 = vmatpush1.xpose.msra.mxu0 0.0
  %207 = vmatprep.subr.mxu0 0.0
  %208 = vmatpush1.xpose.msra.mxu0 0.0
  %209 = vmatprep.subr.mxu0 0.0
  %210 = vmatpush1.xpose.msra.mxu0 0.0
  %211 = vmatprep.subr.mxu0 0.0
  %212 = vmatpush1.xpose.msra.mxu0 0.0
  %213 = vmatprep.subr.mxu0 0.0
  %214 = vmatpush1.xpose.msra.mxu0 0.0
  %215 = vmatprep.subr.mxu0 0.0
  %216 = vmatpush1.xpose.msra.mxu0 0.0
  %217 = vmatprep.mubr.f32.mxu0 0.0
  %218 = vmatmul.mubr.f32.gmra.mrb[0].mxu0 %v149
  %v219 = vpop.f32.mrb[0].mxu0
  %v220 = vadd.f32 0.0, %v219
  %v221 = vpop.f32.mrb[0].mxu0
  %222 = vdwg.mxu0
  %224 = vrot.lane.b32.xlu0 %v142, 96
  %v225 = vpop.permute.xlu0 %224
  %v226 = vsel %vm148, %v142, 0
  %v228 = vsel %vm148, %v225, 0
  %230 = vmatprep.subr.mxu0 0.0
  %231 = vmatpush1.xpose.msra.mxu0 %v228
  %232 = vmatprep.subr.mxu0 0.0
  %233 = vmatpush1.xpose.msra.mxu0 0.0
  %234 = vmatprep.subr.mxu0 0.0
  %235 = vmatpush1.xpose.msra.mxu0 0.0
  %236 = vmatprep.subr.mxu0 0.0
  %237 = vmatpush1.xpose.msra.mxu0 0.0
  %238 = vmatprep.subr.mxu0 0.0
  %239 = vmatpush1.xpose.msra.mxu0 0.0
  %240 = vmatprep.subr.mxu0 0.0
  %241 = vmatpush1.xpose.msra.mxu0 0.0
  %242 = vmatprep.subr.mxu0 0.0
  %243 = vmatpush1.xpose.msra.mxu0 0.0
  %244 = vmatprep.subr.mxu0 0.0
  %245 = vmatpush1.xpose.msra.mxu0 0.0
  %246 = vmatprep.subr.mxu0 0.0
  %247 = vmatpush1.xpose.msra.mxu0 0.0
  %248 = vmatprep.subr.mxu0 0.0
  %249 = vmatpush1.xpose.msra.mxu0 0.0
  %250 = vmatprep.subr.mxu0 0.0
  %251 = vmatpush1.xpose.msra.mxu0 0.0
  %252 = vmatprep.subr.mxu0 0.0
  %253 = vmatpush1.xpose.msra.mxu0 0.0
  %254 = vmatprep.subr.mxu0 0.0
  %255 = vmatpush1.xpose.msra.mxu0 0.0
  %256 = vmatprep.subr.mxu0 0.0
  %257 = vmatpush1.xpose.msra.mxu0 0.0
  %258 = vmatprep.subr.mxu0 0.0
  %259 = vmatpush1.xpose.msra.mxu0 0.0
  %260 = vmatprep.subr.mxu0 0.0
  %261 = vmatpush1.xpose.msra.mxu0 0.0
  %262 = vmatprep.subr.mxu0 0.0
  %263 = vmatpush1.xpose.msra.mxu0 0.0
  %264 = vmatprep.subr.mxu0 0.0
  %265 = vmatpush1.xpose.msra.mxu0 0.0
  %266 = vmatprep.subr.mxu0 0.0
  %267 = vmatpush1.xpose.msra.mxu0 0.0
  %268 = vmatprep.subr.mxu0 0.0
  %269 = vmatpush1.xpose.msra.mxu0 0.0
  %270 = vmatprep.subr.mxu0 0.0
  %271 = vmatpush1.xpose.msra.mxu0 0.0
  %272 = vmatprep.subr.mxu0 0.0
  %273 = vmatpush1.xpose.msra.mxu0 0.0
  %274 = vmatprep.subr.mxu0 0.0
  %275 = vmatpush1.xpose.msra.mxu0 0.0
  %276 = vmatprep.subr.mxu0 0.0
  %277 = vmatpush1.xpose.msra.mxu0 0.0
  %278 = vmatprep.subr.mxu0 0.0
  %279 = vmatpush1.xpose.msra.mxu0 0.0
  %280 = vmatprep.subr.mxu0 0.0
  %281 = vmatpush1.xpose.msra.mxu0 0.0
  %282 = vmatprep.subr.mxu0 0.0
  %283 = vmatpush1.xpose.msra.mxu0 0.0
  %284 = vmatprep.subr.mxu0 0.0
  %285 = vmatpush1.xpose.msra.mxu0 0.0
  %286 = vmatprep.subr.mxu0 0.0
  %287 = vmatpush1.xpose.msra.mxu0 0.0
  %288 = vmatprep.subr.mxu0 0.0
  %289 = vmatpush1.xpose.msra.mxu0 0.0
  %290 = vmatprep.subr.mxu0 0.0
  %291 = vmatpush1.xpose.msra.mxu0 0.0
  %292 = vmatprep.subr.mxu0 0.0
  %293 = vmatpush1.xpose.msra.mxu0 0.0
  %294 = vmatprep.mubr.f32.mxu0 0.0
  %295 = vmatmul.mubr.f32.gmra.mrb[0].mxu0 %v226
  %v296 = vpop.f32.mrb[0].mxu0
  %v297 = vadd.f32 0.0, %v296
  %v298 = vpop.f32.mrb[0].mxu0
  %299 = vdwg.mxu0
  %300 = vrot.lane.b32.xlu0 %v137, 120
  %v301 = vpop.permute.xlu0 %300
  %302 = vrot.lane.b32.xlu0 %v137, 88
  %v303 = vpop.permute.xlu0 %302
  %v304 = vsel %vm148, %v301, 0
  %v306 = vsel %vm148, %v303, 0
  %308 = vmatprep.subr.mxu0 0.0
  %309 = vmatpush1.xpose.msra.mxu0 %v306
  %310 = vmatprep.subr.mxu0 0.0
  %311 = vmatpush1.xpose.msra.mxu0 0.0
  %312 = vmatprep.subr.mxu0 0.0
  %313 = vmatpush1.xpose.msra.mxu0 0.0
  %314 = vmatprep.subr.mxu0 0.0
  %315 = vmatpush1.xpose.msra.mxu0 0.0
  %316 = vmatprep.subr.mxu0 0.0
  %317 = vmatpush1.xpose.msra.mxu0 0.0
  %318 = vmatprep.subr.mxu0 0.0
  %319 = vmatpush1.xpose.msra.mxu0 0.0
  %320 = vmatprep.subr.mxu0 0.0
  %321 = vmatpush1.xpose.msra.mxu0 0.0
  %322 = vmatprep.subr.mxu0 0.0
  %323 = vmatpush1.xpose.msra.mxu0 0.0
  %324 = vmatprep.subr.mxu0 0.0
  %325 = vmatpush1.xpose.msra.mxu0 0.0
  %326 = vmatprep.subr.mxu0 0.0
  %327 = vmatpush1.xpose.msra.mxu0 0.0
  %328 = vmatprep.subr.mxu0 0.0
  %329 = vmatpush1.xpose.msra.mxu0 0.0
  %330 = vmatprep.subr.mxu0 0.0
  %331 = vmatpush1.xpose.msra.mxu0 0.0
  %332 = vmatprep.subr.mxu0 0.0
  %333 = vmatpush1.xpose.msra.mxu0 0.0
  %334 = vmatprep.subr.mxu0 0.0
  %335 = vmatpush1.xpose.msra.mxu0 0.0
  %336 = vmatprep.subr.mxu0 0.0
  %337 = vmatpush1.xpose.msra.mxu0 0.0
  %338 = vmatprep.subr.mxu0 0.0
  %339 = vmatpush1.xpose.msra.mxu0 0.0
  %340 = vmatprep.subr.mxu0 0.0
  %341 = vmatpush1.xpose.msra.mxu0 0.0
  %342 = vmatprep.subr.mxu0 0.0
  %343 = vmatpush1.xpose.msra.mxu0 0.0
  %344 = vmatprep.subr.mxu0 0.0
  %345 = vmatpush1.xpose.msra.mxu0 0.0
  %346 = vmatprep.subr.mxu0 0.0
  %347 = vmatpush1.xpose.msra.mxu0 0.0
  %348 = vmatprep.subr.mxu0 0.0
  %349 = vmatpush1.xpose.msra.mxu0 0.0
  %350 = vmatprep.subr.mxu0 0.0
  %351 = vmatpush1.xpose.msra.mxu0 0.0
  %352 = vmatprep.subr.mxu0 0.0
  %353 = vmatpush1.xpose.msra.mxu0 0.0
  %354 = vmatprep.subr.mxu0 0.0
  %355 = vmatpush1.xpose.msra.mxu0 0.0
  %356 = vmatprep.subr.mxu0 0.0
  %357 = vmatpush1.xpose.msra.mxu0 0.0
  %358 = vmatprep.subr.mxu0 0.0
  %359 = vmatpush1.xpose.msra.mxu0 0.0
  %360 = vmatprep.subr.mxu0 0.0
  %361 = vmatpush1.xpose.msra.mxu0 0.0
  %362 = vmatprep.subr.mxu0 0.0
  %363 = vmatpush1.xpose.msra.mxu0 0.0
  %364 = vmatprep.subr.mxu0 0.0
  %365 = vmatpush1.xpose.msra.mxu0 0.0
  %366 = vmatprep.subr.mxu0 0.0
  %367 = vmatpush1.xpose.msra.mxu0 0.0
  %368 = vmatprep.subr.mxu0 0.0
  %369 = vmatpush1.xpose.msra.mxu0 0.0
  %370 = vmatprep.subr.mxu0 0.0
  %371 = vmatpush1.xpose.msra.mxu0 0.0
  %372 = vmatprep.mubr.f32.mxu0 0.0
  %373 = vmatmul.mubr.f32.gmra.mrb[0].mxu0 %v304
  %v374 = vpop.f32.mrb[0].mxu0
  %v375 = vadd.f32 0.0, %v374
  %v376 = vpop.f32.mrb[0].mxu0
  %377 = vdwg.mxu0
  %378 = vrot.lane.b32.xlu0 %v142, 120
  %v379 = vpop.permute.xlu0 %378
  %380 = vrot.lane.b32.xlu0 %v142, 88
  %v381 = vpop.permute.xlu0 %380
  %v382 = vsel %vm148, %v379, 0
  %v384 = vsel %vm148, %v381, 0
  %386 = vmatprep.subr.mxu0 0.0
  %387 = vmatpush1.xpose.msra.mxu0 %v384
  %388 = vmatprep.subr.mxu0 0.0
  %389 = vmatpush1.xpose.msra.mxu0 0.0
  %390 = vmatprep.subr.mxu0 0.0
  %391 = vmatpush1.xpose.msra.mxu0 0.0
  %392 = vmatprep.subr.mxu0 0.0
  %393 = vmatpush1.xpose.msra.mxu0 0.0
  %394 = vmatprep.subr.mxu0 0.0
  %395 = vmatpush1.xpose.msra.mxu0 0.0
  %396 = vmatprep.subr.mxu0 0.0
  %397 = vmatpush1.xpose.msra.mxu0 0.0
  %398 = vmatprep.subr.mxu0 0.0
  %399 = vmatpush1.xpose.msra.mxu0 0.0
  %400 = vmatprep.subr.mxu0 0.0
  %401 = vmatpush1.xpose.msra.mxu0 0.0
  %402 = vmatprep.subr.mxu0 0.0
  %403 = vmatpush1.xpose.msra.mxu0 0.0
  %404 = vmatprep.subr.mxu0 0.0
  %405 = vmatpush1.xpose.msra.mxu0 0.0
  %406 = vmatprep.subr.mxu0 0.0
  %407 = vmatpush1.xpose.msra.mxu0 0.0
  %408 = vmatprep.subr.mxu0 0.0
  %409 = vmatpush1.xpose.msra.mxu0 0.0
  %410 = vmatprep.subr.mxu0 0.0
  %411 = vmatpush1.xpose.msra.mxu0 0.0
  %412 = vmatprep.subr.mxu0 0.0
  %413 = vmatpush1.xpose.msra.mxu0 0.0
  %414 = vmatprep.subr.mxu0 0.0
  %415 = vmatpush1.xpose.msra.mxu0 0.0
  %416 = vmatprep.subr.mxu0 0.0
  %417 = vmatpush1.xpose.msra.mxu0 0.0
  %418 = vmatprep.subr.mxu0 0.0
  %419 = vmatpush1.xpose.msra.mxu0 0.0
  %420 = vmatprep.subr.mxu0 0.0
  %421 = vmatpush1.xpose.msra.mxu0 0.0
  %422 = vmatprep.subr.mxu0 0.0
  %423 = vmatpush1.xpose.msra.mxu0 0.0
  %424 = vmatprep.subr.mxu0 0.0
  %425 = vmatpush1.xpose.msra.mxu0 0.0
  %426 = vmatprep.subr.mxu0 0.0
  %427 = vmatpush1.xpose.msra.mxu0 0.0
  %428 = vmatprep.subr.mxu0 0.0
  %429 = vmatpush1.xpose.msra.mxu0 0.0
  %430 = vmatprep.subr.mxu0 0.0
  %431 = vmatpush1.xpose.msra.mxu0 0.0
  %432 = vmatprep.subr.mxu0 0.0
  %433 = vmatpush1.xpose.msra.mxu0 0.0
  %434 = vmatprep.subr.mxu0 0.0
  %435 = vmatpush1.xpose.msra.mxu0 0.0
  %436 = vmatprep.subr.mxu0 0.0
  %437 = vmatpush1.xpose.msra.mxu0 0.0
  %438 = vmatprep.subr.mxu0 0.0
  %439 = vmatpush1.xpose.msra.mxu0 0.0
  %440 = vmatprep.subr.mxu0 0.0
  %441 = vmatpush1.xpose.msra.mxu0 0.0
  %442 = vmatprep.subr.mxu0 0.0
  %443 = vmatpush1.xpose.msra.mxu0 0.0
  %444 = vmatprep.subr.mxu0 0.0
  %445 = vmatpush1.xpose.msra.mxu0 0.0
  %446 = vmatprep.subr.mxu0 0.0
  %447 = vmatpush1.xpose.msra.mxu0 0.0
  %448 = vmatprep.subr.mxu0 0.0
  %449 = vmatpush1.xpose.msra.mxu0 0.0
  %450 = vmatprep.mubr.f32.mxu0 0.0
  %451 = vmatmul.mubr.f32.gmra.mrb[0].mxu0 %v382
  %v452 = vpop.f32.mrb[0].mxu0
  %v453 = vadd.f32 0.0, %v452
  %v454 = vpop.f32.mrb[0].mxu0
  %455 = vdwg.mxu0
  %456 = vrot.lane.b32.xlu0 %v137, 112
  %v457 = vpop.permute.xlu0 %456
  %458 = vrot.lane.b32.xlu0 %v137, 80
  %v459 = vpop.permute.xlu0 %458
  %v460 = vsel %vm148, %v457, 0
  %v462 = vsel %vm148, %v459, 0
  %464 = vmatprep.subr.mxu0 0.0
  %465 = vmatpush1.xpose.msra.mxu0 %v462
  %466 = vmatprep.subr.mxu0 0.0
  %467 = vmatpush1.xpose.msra.mxu0 0.0
  %468 = vmatprep.subr.mxu0 0.0
  %469 = vmatpush1.xpose.msra.mxu0 0.0
  %470 = vmatprep.subr.mxu0 0.0
  %471 = vmatpush1.xpose.msra.mxu0 0.0
  %472 = vmatprep.subr.mxu0 0.0
  %473 = vmatpush1.xpose.msra.mxu0 0.0
  %474 = vmatprep.subr.mxu0 0.0
  %475 = vmatpush1.xpose.msra.mxu0 0.0
  %476 = vmatprep.subr.mxu0 0.0
  %477 = vmatpush1.xpose.msra.mxu0 0.0
  %478 = vmatprep.subr.mxu0 0.0
  %479 = vmatpush1.xpose.msra.mxu0 0.0
  %480 = vmatprep.subr.mxu0 0.0
  %481 = vmatpush1.xpose.msra.mxu0 0.0
  %482 = vmatprep.subr.mxu0 0.0
  %483 = vmatpush1.xpose.msra.mxu0 0.0
  %484 = vmatprep.subr.mxu0 0.0
  %485 = vmatpush1.xpose.msra.mxu0 0.0
  %486 = vmatprep.subr.mxu0 0.0
  %487 = vmatpush1.xpose.msra.mxu0 0.0
  %488 = vmatprep.subr.mxu0 0.0
  %489 = vmatpush1.xpose.msra.mxu0 0.0
  %490 = vmatprep.subr.mxu0 0.0
  %491 = vmatpush1.xpose.msra.mxu0 0.0
  %492 = vmatprep.subr.mxu0 0.0
  %493 = vmatpush1.xpose.msra.mxu0 0.0
  %494 = vmatprep.subr.mxu0 0.0
  %495 = vmatpush1.xpose.msra.mxu0 0.0
  %496 = vmatprep.subr.mxu0 0.0
  %497 = vmatpush1.xpose.msra.mxu0 0.0
  %498 = vmatprep.subr.mxu0 0.0
  %499 = vmatpush1.xpose.msra.mxu0 0.0
  %500 = vmatprep.subr.mxu0 0.0
  %501 = vmatpush1.xpose.msra.mxu0 0.0
  %502 = vmatprep.subr.mxu0 0.0
  %503 = vmatpush1.xpose.msra.mxu0 0.0
  %504 = vmatprep.subr.mxu0 0.0
  %505 = vmatpush1.xpose.msra.mxu0 0.0
  %506 = vmatprep.subr.mxu0 0.0
  %507 = vmatpush1.xpose.msra.mxu0 0.0
  %508 = vmatprep.subr.mxu0 0.0
  %509 = vmatpush1.xpose.msra.mxu0 0.0
  %510 = vmatprep.subr.mxu0 0.0
  %511 = vmatpush1.xpose.msra.mxu0 0.0
  %512 = vmatprep.subr.mxu0 0.0
  %513 = vmatpush1.xpose.msra.mxu0 0.0
  %514 = vmatprep.subr.mxu0 0.0
  %515 = vmatpush1.xpose.msra.mxu0 0.0
  %516 = vmatprep.subr.mxu0 0.0
  %517 = vmatpush1.xpose.msra.mxu0 0.0
  %518 = vmatprep.subr.mxu0 0.0
  %519 = vmatpush1.xpose.msra.mxu0 0.0
  %520 = vmatprep.subr.mxu0 0.0
  %521 = vmatpush1.xpose.msra.mxu0 0.0
  %522 = vmatprep.subr.mxu0 0.0
  %523 = vmatpush1.xpose.msra.mxu0 0.0
  %524 = vmatprep.subr.mxu0 0.0
  %525 = vmatpush1.xpose.msra.mxu0 0.0
  %526 = vmatprep.subr.mxu0 0.0
  %527 = vmatpush1.xpose.msra.mxu0 0.0
  %528 = vmatprep.mubr.f32.mxu0 0.0
  %529 = vmatmul.mubr.f32.gmra.mrb[0].mxu0 %v460
  %v530 = vpop.f32.mrb[0].mxu0
  %v531 = vadd.f32 0.0, %v530
  %v532 = vpop.f32.mrb[0].mxu0
  %533 = vdwg.mxu0
  %534 = vrot.lane.b32.xlu0 %v142, 112
  %v535 = vpop.permute.xlu0 %534
  %536 = vrot.lane.b32.xlu0 %v142, 80
  %v537 = vpop.permute.xlu0 %536
  %v538 = vsel %vm148, %v535, 0
  %v540 = vsel %vm148, %v537, 0
  %542 = vmatprep.subr.mxu0 0.0
  %543 = vmatpush1.xpose.msra.mxu0 %v540
  %544 = vmatprep.subr.mxu0 0.0
  %545 = vmatpush1.xpose.msra.mxu0 0.0
  %546 = vmatprep.subr.mxu0 0.0
  %547 = vmatpush1.xpose.msra.mxu0 0.0
  %548 = vmatprep.subr.mxu0 0.0
  %549 = vmatpush1.xpose.msra.mxu0 0.0
  %550 = vmatprep.subr.mxu0 0.0
  %551 = vmatpush1.xpose.msra.mxu0 0.0
  %552 = vmatprep.subr.mxu0 0.0
  %553 = vmatpush1.xpose.msra.mxu0 0.0
  %554 = vmatprep.subr.mxu0 0.0
  %555 = vmatpush1.xpose.msra.mxu0 0.0
  %556 = vmatprep.subr.mxu0 0.0
  %557 = vmatpush1.xpose.msra.mxu0 0.0
  %558 = vmatprep.subr.mxu0 0.0
  %559 = vmatpush1.xpose.msra.mxu0 0.0
  %560 = vmatprep.subr.mxu0 0.0
  %561 = vmatpush1.xpose.msra.mxu0 0.0
  %562 = vmatprep.subr.mxu0 0.0
  %563 = vmatpush1.xpose.msra.mxu0 0.0
  %564 = vmatprep.subr.mxu0 0.0
  %565 = vmatpush1.xpose.msra.mxu0 0.0
  %566 = vmatprep.subr.mxu0 0.0
  %567 = vmatpush1.xpose.msra.mxu0 0.0
  %568 = vmatprep.subr.mxu0 0.0
  %569 = vmatpush1.xpose.msra.mxu0 0.0
  %570 = vmatprep.subr.mxu0 0.0
  %571 = vmatpush1.xpose.msra.mxu0 0.0
  %572 = vmatprep.subr.mxu0 0.0
  %573 = vmatpush1.xpose.msra.mxu0 0.0
  %574 = vmatprep.subr.mxu0 0.0
  %575 = vmatpush1.xpose.msra.mxu0 0.0
  %576 = vmatprep.subr.mxu0 0.0
  %577 = vmatpush1.xpose.msra.mxu0 0.0
  %578 = vmatprep.subr.mxu0 0.0
  %579 = vmatpush1.xpose.msra.mxu0 0.0
  %580 = vmatprep.subr.mxu0 0.0
  %581 = vmatpush1.xpose.msra.mxu0 0.0
  %582 = vmatprep.subr.mxu0 0.0
  %583 = vmatpush1.xpose.msra.mxu0 0.0
  %584 = vmatprep.subr.mxu0 0.0
  %585 = vmatpush1.xpose.msra.mxu0 0.0
  %586 = vmatprep.subr.mxu0 0.0
  %587 = vmatpush1.xpose.msra.mxu0 0.0
  %588 = vmatprep.subr.mxu0 0.0
  %589 = vmatpush1.xpose.msra.mxu0 0.0
  %590 = vmatprep.subr.mxu0 0.0
  %591 = vmatpush1.xpose.msra.mxu0 0.0
  %592 = vmatprep.subr.mxu0 0.0
  %593 = vmatpush1.xpose.msra.mxu0 0.0
  %594 = vmatprep.subr.mxu0 0.0
  %595 = vmatpush1.xpose.msra.mxu0 0.0
  %596 = vmatprep.subr.mxu0 0.0
  %597 = vmatpush1.xpose.msra.mxu0 0.0
  %598 = vmatprep.subr.mxu0 0.0
  %599 = vmatpush1.xpose.msra.mxu0 0.0
  %600 = vmatprep.subr.mxu0 0.0
  %601 = vmatpush1.xpose.msra.mxu0 0.0
  %602 = vmatprep.subr.mxu0 0.0
  %603 = vmatpush1.xpose.msra.mxu0 0.0
  %604 = vmatprep.subr.mxu0 0.0
  %605 = vmatpush1.xpose.msra.mxu0 0.0
  %606 = vmatprep.mubr.f32.mxu0 0.0
  %607 = vmatmul.mubr.f32.gmra.mrb[0].mxu0 %v538
  %v608 = vpop.f32.mrb[0].mxu0
  %v609 = vadd.f32 0.0, %v608
  %v610 = vpop.f32.mrb[0].mxu0
  %611 = vdwg.mxu0
  %612 = vrot.lane.b32.xlu0 %v137, 104
  %v613 = vpop.permute.xlu0 %612
  %614 = vrot.lane.b32.xlu0 %v137, 72
  %v615 = vpop.permute.xlu0 %614
  %v616 = vsel %vm148, %v613, 0
  %v618 = vsel %vm148, %v615, 0
  %620 = vmatprep.subr.mxu0 0.0
  %621 = vmatpush1.xpose.msra.mxu0 %v618
  %622 = vmatprep.subr.mxu0 0.0
  %623 = vmatpush1.xpose.msra.mxu0 0.0
  %624 = vmatprep.subr.mxu0 0.0
  %625 = vmatpush1.xpose.msra.mxu0 0.0
  %626 = vmatprep.subr.mxu0 0.0
  %627 = vmatpush1.xpose.msra.mxu0 0.0
  %628 = vmatprep.subr.mxu0 0.0
  %629 = vmatpush1.xpose.msra.mxu0 0.0
  %630 = vmatprep.subr.mxu0 0.0
  %631 = vmatpush1.xpose.msra.mxu0 0.0
  %632 = vmatprep.subr.mxu0 0.0
  %633 = vmatpush1.xpose.msra.mxu0 0.0
  %634 = vmatprep.subr.mxu0 0.0
  %635 = vmatpush1.xpose.msra.mxu0 0.0
  %636 = vmatprep.subr.mxu0 0.0
  %637 = vmatpush1.xpose.msra.mxu0 0.0
  %638 = vmatprep.subr.mxu0 0.0
  %639 = vmatpush1.xpose.msra.mxu0 0.0
  %640 = vmatprep.subr.mxu0 0.0
  %641 = vmatpush1.xpose.msra.mxu0 0.0
  %642 = vmatprep.subr.mxu0 0.0
  %643 = vmatpush1.xpose.msra.mxu0 0.0
  %644 = vmatprep.subr.mxu0 0.0
  %645 = vmatpush1.xpose.msra.mxu0 0.0
  %646 = vmatprep.subr.mxu0 0.0
  %647 = vmatpush1.xpose.msra.mxu0 0.0
  %648 = vmatprep.subr.mxu0 0.0
  %649 = vmatpush1.xpose.msra.mxu0 0.0
  %650 = vmatprep.subr.mxu0 0.0
  %651 = vmatpush1.xpose.msra.mxu0 0.0
  %652 = vmatprep.subr.mxu0 0.0
  %653 = vmatpush1.xpose.msra.mxu0 0.0
  %654 = vmatprep.subr.mxu0 0.0
  %655 = vmatpush1.xpose.msra.mxu0 0.0
  %656 = vmatprep.subr.mxu0 0.0
  %657 = vmatpush1.xpose.msra.mxu0 0.0
  %658 = vmatprep.subr.mxu0 0.0
  %659 = vmatpush1.xpose.msra.mxu0 0.0
  %660 = vmatprep.subr.mxu0 0.0
  %661 = vmatpush1.xpose.msra.mxu0 0.0
  %662 = vmatprep.subr.mxu0 0.0
  %663 = vmatpush1.xpose.msra.mxu0 0.0
  %664 = vmatprep.subr.mxu0 0.0
  %665 = vmatpush1.xpose.msra.mxu0 0.0
  %666 = vmatprep.subr.mxu0 0.0
  %667 = vmatpush1.xpose.msra.mxu0 0.0
  %668 = vmatprep.subr.mxu0 0.0
  %669 = vmatpush1.xpose.msra.mxu0 0.0
  %670 = vmatprep.subr.mxu0 0.0
  %671 = vmatpush1.xpose.msra.mxu0 0.0
  %672 = vmatprep.subr.mxu0 0.0
  %673 = vmatpush1.xpose.msra.mxu0 0.0
  %674 = vmatprep.subr.mxu0 0.0
  %675 = vmatpush1.xpose.msra.mxu0 0.0
  %676 = vmatprep.subr.mxu0 0.0
  %677 = vmatpush1.xpose.msra.mxu0 0.0
  %678 = vmatprep.subr.mxu0 0.0
  %679 = vmatpush1.xpose.msra.mxu0 0.0
  %680 = vmatprep.subr.mxu0 0.0
  %681 = vmatpush1.xpose.msra.mxu0 0.0
  %682 = vmatprep.subr.mxu0 0.0
  %683 = vmatpush1.xpose.msra.mxu0 0.0
  %684 = vmatprep.mubr.f32.mxu0 0.0
  %685 = vmatmul.mubr.f32.gmra.mrb[0].mxu0 %v616
  %v686 = vpop.f32.mrb[0].mxu0
  %v687 = vadd.f32 0.0, %v686
  %v688 = vpop.f32.mrb[0].mxu0
  %689 = vdwg.mxu0
  %690 = vrot.lane.b32.xlu0 %v142, 104
  %v691 = vpop.permute.xlu0 %690
  %692 = vrot.lane.b32.xlu0 %v142, 72
  %v693 = vpop.permute.xlu0 %692
  %v694 = vsel %vm148, %v691, 0
  %v696 = vsel %vm148, %v693, 0
  %698 = vmatprep.subr.mxu0 0.0
  %699 = vmatpush1.xpose.msra.mxu0 %v696
  %700 = vmatprep.subr.mxu0 0.0
  %701 = vmatpush1.xpose.msra.mxu0 0.0
  %702 = vmatprep.subr.mxu0 0.0
  %703 = vmatpush1.xpose.msra.mxu0 0.0
  %704 = vmatprep.subr.mxu0 0.0
  %705 = vmatpush1.xpose.msra.mxu0 0.0
  %706 = vmatprep.subr.mxu0 0.0
  %707 = vmatpush1.xpose.msra.mxu0 0.0
  %708 = vmatprep.subr.mxu0 0.0
  %709 = vmatpush1.xpose.msra.mxu0 0.0
  %710 = vmatprep.subr.mxu0 0.0
  %711 = vmatpush1.xpose.msra.mxu0 0.0
  %712 = vmatprep.subr.mxu0 0.0
  %713 = vmatpush1.xpose.msra.mxu0 0.0
  %714 = vmatprep.subr.mxu0 0.0
  %715 = vmatpush1.xpose.msra.mxu0 0.0
  %716 = vmatprep.subr.mxu0 0.0
  %717 = vmatpush1.xpose.msra.mxu0 0.0
  %718 = vmatprep.subr.mxu0 0.0
  %719 = vmatpush1.xpose.msra.mxu0 0.0
  %720 = vmatprep.subr.mxu0 0.0
  %721 = vmatpush1.xpose.msra.mxu0 0.0
  %722 = vmatprep.subr.mxu0 0.0
  %723 = vmatpush1.xpose.msra.mxu0 0.0
  %724 = vmatprep.subr.mxu0 0.0
  %725 = vmatpush1.xpose.msra.mxu0 0.0
  %726 = vmatprep.subr.mxu0 0.0
  %727 = vmatpush1.xpose.msra.mxu0 0.0
  %728 = vmatprep.subr.mxu0 0.0
  %729 = vmatpush1.xpose.msra.mxu0 0.0
  %730 = vmatprep.subr.mxu0 0.0
  %731 = vmatpush1.xpose.msra.mxu0 0.0
  %732 = vmatprep.subr.mxu0 0.0
  %733 = vmatpush1.xpose.msra.mxu0 0.0
  %734 = vmatprep.subr.mxu0 0.0
  %735 = vmatpush1.xpose.msra.mxu0 0.0
  %736 = vmatprep.subr.mxu0 0.0
  %737 = vmatpush1.xpose.msra.mxu0 0.0
  %738 = vmatprep.subr.mxu0 0.0
  %739 = vmatpush1.xpose.msra.mxu0 0.0
  %740 = vmatprep.subr.mxu0 0.0
  %741 = vmatpush1.xpose.msra.mxu0 0.0
  %742 = vmatprep.subr.mxu0 0.0
  %743 = vmatpush1.xpose.msra.mxu0 0.0
  %744 = vmatprep.subr.mxu0 0.0
  %745 = vmatpush1.xpose.msra.mxu0 0.0
  %746 = vmatprep.subr.mxu0 0.0
  %747 = vmatpush1.xpose.msra.mxu0 0.0
  %748 = vmatprep.subr.mxu0 0.0
  %749 = vmatpush1.xpose.msra.mxu0 0.0
  %750 = vmatprep.subr.mxu0 0.0
  %751 = vmatpush1.xpose.msra.mxu0 0.0
  %752 = vmatprep.subr.mxu0 0.0
  %753 = vmatpush1.xpose.msra.mxu0 0.0
  %754 = vmatprep.subr.mxu0 0.0
  %755 = vmatpush1.xpose.msra.mxu0 0.0
  %756 = vmatprep.subr.mxu0 0.0
  %757 = vmatpush1.xpose.msra.mxu0 0.0
  %758 = vmatprep.subr.mxu0 0.0
  %759 = vmatpush1.xpose.msra.mxu0 0.0
  %760 = vmatprep.subr.mxu0 0.0
  %761 = vmatpush1.xpose.msra.mxu0 0.0
  %762 = vmatprep.mubr.f32.mxu0 0.0
  %763 = vmatmul.mubr.f32.gmra.mrb[0].mxu0 %v694
  %v764 = vpop.f32.mrb[0].mxu0
  %v765 = vadd.f32 0.0, %v764
  %v766 = vpop.f32.mrb[0].mxu0
  %767 = vdwg.mxu0
  %v768 = vsel %vm148, %v220, -inf
  %769 = vmax.xlane.f32.xlu0 %v768
  %v770 = vpop.xlane.xlu0 %769
  %v771 = vsel %vm148, %v297, -inf
  %772 = vmax.xlane.f32.xlu0 %v771
  %v773 = vpop.xlane.xlu0 %772
  %v774 = vsel %vm148, %v375, -inf
  %775 = vmax.xlane.f32.xlu0 %v774
  %v776 = vpop.xlane.xlu0 %775
  %v777 = vsel %vm148, %v453, -inf
  %778 = vmax.xlane.f32.xlu0 %v777
  %v779 = vpop.xlane.xlu0 %778
  %v780 = vsel %vm148, %v531, -inf
  %781 = vmax.xlane.f32.xlu0 %v780
  %v782 = vpop.xlane.xlu0 %781
  %v783 = vsel %vm148, %v609, -inf
  %784 = vmax.xlane.f32.xlu0 %v783
  %v785 = vpop.xlane.xlu0 %784
  %v786 = vsel %vm148, %v687, -inf
  %787 = vmax.xlane.f32.xlu0 %v786
  %v788 = vpop.xlane.xlu0 %787
  %v789 = vsel %vm148, %v765, -inf
  %790 = vmax.xlane.f32.xlu0 %v789
  %v791 = vpop.xlane.xlu0 %790
  %v792 = vsub.f32 %v220, %v770
  %v793 = vsub.f32 %v297, %v773
  %v794 = vsub.f32 %v375, %v776
  %v795 = vsub.f32 %v453, %v779
  %v796 = vsub.f32 %v531, %v782
  %v797 = vsub.f32 %v609, %v785
  %v798 = vsub.f32 %v687, %v788
  %v799 = vsub.f32 %v765, %v791
  %v800 = vmul.f32 %v792, 1.442695
  %v801 = vpow.pop %v800
  %v802 = vmul.f32 %v793, 1.442695
  %v803 = vpow.pop %v802
  %v804 = vmul.f32 %v794, 1.442695
  %v805 = vpow.pop %v804
  %v806 = vmul.f32 %v795, 1.442695
  %v807 = vpow.pop %v806
  %v808 = vmul.f32 %v796, 1.442695
  %v809 = vpow.pop %v808
  %v810 = vmul.f32 %v797, 1.442695
  %v811 = vpow.pop %v810
  %v812 = vmul.f32 %v798, 1.442695
  %v813 = vpow.pop %v812
  %v814 = vmul.f32 %v799, 1.442695
  %v815 = vpow.pop %v814
  %v816 = vsel %vm148, %v801, 0.0
  %817 = vadd.xlane.f32.xlu0 %v816
  %v818 = vpop.xlane.xlu0 %817
  %v819 = vsel %vm148, %v803, 0.0
  %820 = vadd.xlane.f32.xlu0 %v819
  %v821 = vpop.xlane.xlu0 %820
  %v822 = vsel %vm148, %v805, 0.0
  %823 = vadd.xlane.f32.xlu0 %v822
  %v824 = vpop.xlane.xlu0 %823
  %v825 = vsel %vm148, %v807, 0.0
  %826 = vadd.xlane.f32.xlu0 %v825
  %v827 = vpop.xlane.xlu0 %826
  %v828 = vsel %vm148, %v809, 0.0
  %829 = vadd.xlane.f32.xlu0 %v828
  %v830 = vpop.xlane.xlu0 %829
  %v831 = vsel %vm148, %v811, 0.0
  %832 = vadd.xlane.f32.xlu0 %v831
  %v833 = vpop.xlane.xlu0 %832
  %v834 = vsel %vm148, %v813, 0.0
  %835 = vadd.xlane.f32.xlu0 %v834
  %v836 = vpop.xlane.xlu0 %835
  %v837 = vsel %vm148, %v815, 0.0
  %838 = vadd.xlane.f32.xlu0 %v837
  %v839 = vpop.xlane.xlu0 %838
  %v840 = vrcp.pop %v818
  %v841 = vrcp.pop %v821
  %v842 = vrcp.pop %v824
  %v843 = vrcp.pop %v827
  %v844 = vrcp.pop %v830
  %v845 = vrcp.pop %v833
  %v846 = vrcp.pop %v836
  %v847 = vrcp.pop %v839
  %v848 = vmul.f32 %v801, %v840
  %v849 = vmul.f32 %v803, %v841
  %v850 = vmul.f32 %v805, %v842
  %v851 = vmul.f32 %v807, %v843
  %v852 = vmul.f32 %v809, %v844
  %v853 = vmul.f32 %v811, %v845
  %v854 = vmul.f32 %v813, %v846
  %v855 = vmul.f32 %v815, %v847
  %856 = vrot.lane.b32.xlu0 %v137, 64
  %v857 = vpop.permute.xlu0 %856
  %v860 = vsel %vm148, %v848, 0
  %862 = vmatprep.subr.mxu0 0.0
  %863 = vmatpush1.msra.mxu0 %v857
  %864 = vmatprep.subr.mxu0 0.0
  %865 = vmatpush1.msra.mxu0 0.0
  %866 = vmatprep.subr.mxu0 0.0
  %867 = vmatpush1.msra.mxu0 0.0
  %868 = vmatprep.subr.mxu0 0.0
  %869 = vmatpush1.msra.mxu0 0.0
  %870 = vmatprep.subr.mxu0 0.0
  %871 = vmatpush1.msra.mxu0 0.0
  %872 = vmatprep.subr.mxu0 0.0
  %873 = vmatpush1.msra.mxu0 0.0
  %874 = vmatprep.subr.mxu0 0.0
  %875 = vmatpush1.msra.mxu0 0.0
  %876 = vmatprep.subr.mxu0 0.0
  %877 = vmatpush1.msra.mxu0 0.0
  %878 = vmatprep.subr.mxu0 0.0
  %879 = vmatpush1.msra.mxu0 0.0
  %880 = vmatprep.subr.mxu0 0.0
  %881 = vmatpush1.msra.mxu0 0.0
  %882 = vmatprep.subr.mxu0 0.0
  %883 = vmatpush1.msra.mxu0 0.0
  %884 = vmatprep.subr.mxu0 0.0
  %885 = vmatpush1.msra.mxu0 0.0
  %886 = vmatprep.subr.mxu0 0.0
  %887 = vmatpush1.msra.mxu0 0.0
  %888 = vmatprep.subr.mxu0 0.0
  %889 = vmatpush1.msra.mxu0 0.0
  %890 = vmatprep.subr.mxu0 0.0
  %891 = vmatpush1.msra.mxu0 0.0
  %892 = vmatprep.subr.mxu0 0.0
  %893 = vmatpush1.msra.mxu0 0.0
  %894 = vmatprep.subr.mxu0 0.0
  %895 = vmatpush1.msra.mxu0 0.0
  %896 = vmatprep.subr.mxu0 0.0
  %897 = vmatpush1.msra.mxu0 0.0
  %898 = vmatprep.subr.mxu0 0.0
  %899 = vmatpush1.msra.mxu0 0.0
  %900 = vmatprep.subr.mxu0 0.0
  %901 = vmatpush1.msra.mxu0 0.0
  %902 = vmatprep.subr.mxu0 0.0
  %903 = vmatpush1.msra.mxu0 0.0
  %904 = vmatprep.subr.mxu0 0.0
  %905 = vmatpush1.msra.mxu0 0.0
  %906 = vmatprep.subr.mxu0 0.0
  %907 = vmatpush1.msra.mxu0 0.0
  %908 = vmatprep.subr.mxu0 0.0
  %909 = vmatpush1.msra.mxu0 0.0
  %910 = vmatprep.subr.mxu0 0.0
  %911 = vmatpush1.msra.mxu0 0.0
  %912 = vmatprep.subr.mxu0 0.0
  %913 = vmatpush1.msra.mxu0 0.0
  %914 = vmatprep.subr.mxu0 0.0
  %915 = vmatpush1.msra.mxu0 0.0
  %916 = vmatprep.subr.mxu0 0.0
  %917 = vmatpush1.msra.mxu0 0.0
  %918 = vmatprep.subr.mxu0 0.0
  %919 = vmatpush1.msra.mxu0 0.0
  %920 = vmatprep.subr.mxu0 0.0
  %921 = vmatpush1.msra.mxu0 0.0
  %922 = vmatprep.subr.mxu0 0.0
  %923 = vmatpush1.msra.mxu0 0.0
  %924 = vmatprep.subr.mxu0 0.0
  %925 = vmatpush1.msra.mxu0 0.0
  %926 = vmatprep.mubr.f32.mxu0 0.0
  %927 = vmatmul.mubr.f32.gmra.mrb[0].mxu0 %v860
  %v928 = vpop.f32.mrb[0].mxu0
  %v929 = vadd.f32 0.0, %v928
  %v930 = vpop.f32.mrb[0].mxu0
  %931 = vdwg.mxu0
  %932 = vrot.lane.b32.xlu0 %v142, 64
  %v933 = vpop.permute.xlu0 %932
  %v936 = vsel %vm148, %v849, 0
  %938 = vmatprep.subr.mxu0 0.0
  %939 = vmatpush1.msra.mxu0 %v933
  %940 = vmatprep.subr.mxu0 0.0
  %941 = vmatpush1.msra.mxu0 0.0
  %942 = vmatprep.subr.mxu0 0.0
  %943 = vmatpush1.msra.mxu0 0.0
  %944 = vmatprep.subr.mxu0 0.0
  %945 = vmatpush1.msra.mxu0 0.0
  %946 = vmatprep.subr.mxu0 0.0
  %947 = vmatpush1.msra.mxu0 0.0
  %948 = vmatprep.subr.mxu0 0.0
  %949 = vmatpush1.msra.mxu0 0.0
  %950 = vmatprep.subr.mxu0 0.0
  %951 = vmatpush1.msra.mxu0 0.0
  %952 = vmatprep.subr.mxu0 0.0
  %953 = vmatpush1.msra.mxu0 0.0
  %954 = vmatprep.subr.mxu0 0.0
  %955 = vmatpush1.msra.mxu0 0.0
  %956 = vmatprep.subr.mxu0 0.0
  %957 = vmatpush1.msra.mxu0 0.0
  %958 = vmatprep.subr.mxu0 0.0
  %959 = vmatpush1.msra.mxu0 0.0
  %960 = vmatprep.subr.mxu0 0.0
  %961 = vmatpush1.msra.mxu0 0.0
  %962 = vmatprep.subr.mxu0 0.0
  %963 = vmatpush1.msra.mxu0 0.0
  %964 = vmatprep.subr.mxu0 0.0
  %965 = vmatpush1.msra.mxu0 0.0
  %966 = vmatprep.subr.mxu0 0.0
  %967 = vmatpush1.msra.mxu0 0.0
  %968 = vmatprep.subr.mxu0 0.0
  %969 = vmatpush1.msra.mxu0 0.0
  %970 = vmatprep.subr.mxu0 0.0
  %971 = vmatpush1.msra.mxu0 0.0
  %972 = vmatprep.subr.mxu0 0.0
  %973 = vmatpush1.msra.mxu0 0.0
  %974 = vmatprep.subr.mxu0 0.0
  %975 = vmatpush1.msra.mxu0 0.0
  %976 = vmatprep.subr.mxu0 0.0
  %977 = vmatpush1.msra.mxu0 0.0
  %978 = vmatprep.subr.mxu0 0.0
  %979 = vmatpush1.msra.mxu0 0.0
  %980 = vmatprep.subr.mxu0 0.0
  %981 = vmatpush1.msra.mxu0 0.0
  %982 = vmatprep.subr.mxu0 0.0
  %983 = vmatpush1.msra.mxu0 0.0
  %984 = vmatprep.subr.mxu0 0.0
  %985 = vmatpush1.msra.mxu0 0.0
  %986 = vmatprep.subr.mxu0 0.0
  %987 = vmatpush1.msra.mxu0 0.0
  %988 = vmatprep.subr.mxu0 0.0
  %989 = vmatpush1.msra.mxu0 0.0
  %990 = vmatprep.subr.mxu0 0.0
  %991 = vmatpush1.msra.mxu0 0.0
  %992 = vmatprep.subr.mxu0 0.0
  %993 = vmatpush1.msra.mxu0 0.0
  %994 = vmatprep.subr.mxu0 0.0
  %995 = vmatpush1.msra.mxu0 0.0
  %996 = vmatprep.subr.mxu0 0.0
  %997 = vmatpush1.msra.mxu0 0.0
  %998 = vmatprep.subr.mxu0 0.0
  %999 = vmatpush1.msra.mxu0 0.0
  %1000 = vmatprep.subr.mxu0 0.0
  %1001 = vmatpush1.msra.mxu0 0.0
  %1002 = vmatprep.mubr.f32.mxu0 0.0
  %1003 = vmatmul.mubr.f32.gmra.mrb[0].mxu0 %v936
  %v1004 = vpop.f32.mrb[0].mxu0
  %v1005 = vadd.f32 0.0, %v1004
  %v1006 = vpop.f32.mrb[0].mxu0
  %1007 = vdwg.mxu0
  %1008 = vrot.lane.b32.xlu0 %v137, 56
  %v1009 = vpop.permute.xlu0 %1008
  %v1012 = vsel %vm148, %v850, 0
  %1014 = vmatprep.subr.mxu0 0.0
  %1015 = vmatpush1.msra.mxu0 %v1009
  %1016 = vmatprep.subr.mxu0 0.0
  %1017 = vmatpush1.msra.mxu0 0.0
  %1018 = vmatprep.subr.mxu0 0.0
  %1019 = vmatpush1.msra.mxu0 0.0
  %1020 = vmatprep.subr.mxu0 0.0
  %1021 = vmatpush1.msra.mxu0 0.0
  %1022 = vmatprep.subr.mxu0 0.0
  %1023 = vmatpush1.msra.mxu0 0.0
  %1024 = vmatprep.subr.mxu0 0.0
  %1025 = vmatpush1.msra.mxu0 0.0
  %1026 = vmatprep.subr.mxu0 0.0
  %1027 = vmatpush1.msra.mxu0 0.0
  %1028 = vmatprep.subr.mxu0 0.0
  %1029 = vmatpush1.msra.mxu0 0.0
  %1030 = vmatprep.subr.mxu0 0.0
  %1031 = vmatpush1.msra.mxu0 0.0
  %1032 = vmatprep.subr.mxu0 0.0
  %1033 = vmatpush1.msra.mxu0 0.0
  %1034 = vmatprep.subr.mxu0 0.0
  %1035 = vmatpush1.msra.mxu0 0.0
  %1036 = vmatprep.subr.mxu0 0.0
  %1037 = vmatpush1.msra.mxu0 0.0
  %1038 = vmatprep.subr.mxu0 0.0
  %1039 = vmatpush1.msra.mxu0 0.0
  %1040 = vmatprep.subr.mxu0 0.0
  %1041 = vmatpush1.msra.mxu0 0.0
  %1042 = vmatprep.subr.mxu0 0.0
  %1043 = vmatpush1.msra.mxu0 0.0
  %1044 = vmatprep.subr.mxu0 0.0
  %1045 = vmatpush1.msra.mxu0 0.0
  %1046 = vmatprep.subr.mxu0 0.0
  %1047 = vmatpush1.msra.mxu0 0.0
  %1048 = vmatprep.subr.mxu0 0.0
  %1049 = vmatpush1.msra.mxu0 0.0
  %1050 = vmatprep.subr.mxu0 0.0
  %1051 = vmatpush1.msra.mxu0 0.0
  %1052 = vmatprep.subr.mxu0 0.0
  %1053 = vmatpush1.msra.mxu0 0.0
  %1054 = vmatprep.subr.mxu0 0.0
  %1055 = vmatpush1.msra.mxu0 0.0
  %1056 = vmatprep.subr.mxu0 0.0
  %1057 = vmatpush1.msra.mxu0 0.0
  %1058 = vmatprep.subr.mxu0 0.0
  %1059 = vmatpush1.msra.mxu0 0.0
  %1060 = vmatprep.subr.mxu0 0.0
  %1061 = vmatpush1.msra.mxu0 0.0
  %1062 = vmatprep.subr.mxu0 0.0
  %1063 = vmatpush1.msra.mxu0 0.0
  %1064 = vmatprep.subr.mxu0 0.0
  %1065 = vmatpush1.msra.mxu0 0.0
  %1066 = vmatprep.subr.mxu0 0.0
  %1067 = vmatpush1.msra.mxu0 0.0
  %1068 = vmatprep.subr.mxu0 0.0
  %1069 = vmatpush1.msra.mxu0 0.0
  %1070 = vmatprep.subr.mxu0 0.0
  %1071 = vmatpush1.msra.mxu0 0.0
  %1072 = vmatprep.subr.mxu0 0.0
  %1073 = vmatpush1.msra.mxu0 0.0
  %1074 = vmatprep.subr.mxu0 0.0
  %1075 = vmatpush1.msra.mxu0 0.0
  %1076 = vmatprep.subr.mxu0 0.0
  %1077 = vmatpush1.msra.mxu0 0.0
  %1078 = vmatprep.mubr.f32.mxu0 0.0
  %1079 = vmatmul.mubr.f32.gmra.mrb[0].mxu0 %v1012
  %v1080 = vpop.f32.mrb[0].mxu0
  %v1081 = vadd.f32 0.0, %v1080
  %v1082 = vpop.f32.mrb[0].mxu0
  %1083 = vdwg.mxu0
  %1084 = vrot.lane.b32.xlu0 %v142, 56
  %v1085 = vpop.permute.xlu0 %1084
  %v1088 = vsel %vm148, %v851, 0
  %1090 = vmatprep.subr.mxu0 0.0
  %1091 = vmatpush1.msra.mxu0 %v1085
  %1092 = vmatprep.subr.mxu0 0.0
  %1093 = vmatpush1.msra.mxu0 0.0
  %1094 = vmatprep.subr.mxu0 0.0
  %1095 = vmatpush1.msra.mxu0 0.0
  %1096 = vmatprep.subr.mxu0 0.0
  %1097 = vmatpush1.msra.mxu0 0.0
  %1098 = vmatprep.subr.mxu0 0.0
  %1099 = vmatpush1.msra.mxu0 0.0
  %1100 = vmatprep.subr.mxu0 0.0
  %1101 = vmatpush1.msra.mxu0 0.0
  %1102 = vmatprep.subr.mxu0 0.0
  %1103 = vmatpush1.msra.mxu0 0.0
  %1104 = vmatprep.subr.mxu0 0.0
  %1105 = vmatpush1.msra.mxu0 0.0
  %1106 = vmatprep.subr.mxu0 0.0
  %1107 = vmatpush1.msra.mxu0 0.0
  %1108 = vmatprep.subr.mxu0 0.0
  %1109 = vmatpush1.msra.mxu0 0.0
  %1110 = vmatprep.subr.mxu0 0.0
  %1111 = vmatpush1.msra.mxu0 0.0
  %1112 = vmatprep.subr.mxu0 0.0
  %1113 = vmatpush1.msra.mxu0 0.0
  %1114 = vmatprep.subr.mxu0 0.0
  %1115 = vmatpush1.msra.mxu0 0.0
  %1116 = vmatprep.subr.mxu0 0.0
  %1117 = vmatpush1.msra.mxu0 0.0
  %1118 = vmatprep.subr.mxu0 0.0
  %1119 = vmatpush1.msra.mxu0 0.0
  %1120 = vmatprep.subr.mxu0 0.0
  %1121 = vmatpush1.msra.mxu0 0.0
  %1122 = vmatprep.subr.mxu0 0.0
  %1123 = vmatpush1.msra.mxu0 0.0
  %1124 = vmatprep.subr.mxu0 0.0
  %1125 = vmatpush1.msra.mxu0 0.0
  %1126 = vmatprep.subr.mxu0 0.0
  %1127 = vmatpush1.msra.mxu0 0.0
  %1128 = vmatprep.subr.mxu0 0.0
  %1129 = vmatpush1.msra.mxu0 0.0
  %1130 = vmatprep.subr.mxu0 0.0
  %1131 = vmatpush1.msra.mxu0 0.0
  %1132 = vmatprep.subr.mxu0 0.0
  %1133 = vmatpush1.msra.mxu0 0.0
  %1134 = vmatprep.subr.mxu0 0.0
  %1135 = vmatpush1.msra.mxu0 0.0
  %1136 = vmatprep.subr.mxu0 0.0
  %1137 = vmatpush1.msra.mxu0 0.0
  %1138 = vmatprep.subr.mxu0 0.0
  %1139 = vmatpush1.msra.mxu0 0.0
  %1140 = vmatprep.subr.mxu0 0.0
  %1141 = vmatpush1.msra.mxu0 0.0
  %1142 = vmatprep.subr.mxu0 0.0
  %1143 = vmatpush1.msra.mxu0 0.0
  %1144 = vmatprep.subr.mxu0 0.0
  %1145 = vmatpush1.msra.mxu0 0.0
  %1146 = vmatprep.subr.mxu0 0.0
  %1147 = vmatpush1.msra.mxu0 0.0
  %1148 = vmatprep.subr.mxu0 0.0
  %1149 = vmatpush1.msra.mxu0 0.0
  %1150 = vmatprep.subr.mxu0 0.0
  %1151 = vmatpush1.msra.mxu0 0.0
  %1152 = vmatprep.subr.mxu0 0.0
  %1153 = vmatpush1.msra.mxu0 0.0
  %1154 = vmatprep.mubr.f32.mxu0 0.0
  %1155 = vmatmul.mubr.f32.gmra.mrb[0].mxu0 %v1088
  %v1156 = vpop.f32.mrb[0].mxu0
  %v1157 = vadd.f32 0.0, %v1156
  %v1158 = vpop.f32.mrb[0].mxu0
  %1159 = vdwg.mxu0
  %1160 = vrot.lane.b32.xlu0 %v137, 48
  %v1161 = vpop.permute.xlu0 %1160
  %v1164 = vsel %vm148, %v852, 0
  %1166 = vmatprep.subr.mxu0 0.0
  %1167 = vmatpush1.msra.mxu0 %v1161
  %1168 = vmatprep.subr.mxu0 0.0
  %1169 = vmatpush1.msra.mxu0 0.0
  %1170 = vmatprep.subr.mxu0 0.0
  %1171 = vmatpush1.msra.mxu0 0.0
  %1172 = vmatprep.subr.mxu0 0.0
  %1173 = vmatpush1.msra.mxu0 0.0
  %1174 = vmatprep.subr.mxu0 0.0
  %1175 = vmatpush1.msra.mxu0 0.0
  %1176 = vmatprep.subr.mxu0 0.0
  %1177 = vmatpush1.msra.mxu0 0.0
  %1178 = vmatprep.subr.mxu0 0.0
  %1179 = vmatpush1.msra.mxu0 0.0
  %1180 = vmatprep.subr.mxu0 0.0
  %1181 = vmatpush1.msra.mxu0 0.0
  %1182 = vmatprep.subr.mxu0 0.0
  %1183 = vmatpush1.msra.mxu0 0.0
  %1184 = vmatprep.subr.mxu0 0.0
  %1185 = vmatpush1.msra.mxu0 0.0
  %1186 = vmatprep.subr.mxu0 0.0
  %1187 = vmatpush1.msra.mxu0 0.0
  %1188 = vmatprep.subr.mxu0 0.0
  %1189 = vmatpush1.msra.mxu0 0.0
  %1190 = vmatprep.subr.mxu0 0.0
  %1191 = vmatpush1.msra.mxu0 0.0
  %1192 = vmatprep.subr.mxu0 0.0
  %1193 = vmatpush1.msra.mxu0 0.0
  %1194 = vmatprep.subr.mxu0 0.0
  %1195 = vmatpush1.msra.mxu0 0.0
  %1196 = vmatprep.subr.mxu0 0.0
  %1197 = vmatpush1.msra.mxu0 0.0
  %1198 = vmatprep.subr.mxu0 0.0
  %1199 = vmatpush1.msra.mxu0 0.0
  %1200 = vmatprep.subr.mxu0 0.0
  %1201 = vmatpush1.msra.mxu0 0.0
  %1202 = vmatprep.subr.mxu0 0.0
  %1203 = vmatpush1.msra.mxu0 0.0
  %1204 = vmatprep.subr.mxu0 0.0
  %1205 = vmatpush1.msra.mxu0 0.0
  %1206 = vmatprep.subr.mxu0 0.0
  %1207 = vmatpush1.msra.mxu0 0.0
  %1208 = vmatprep.subr.mxu0 0.0
  %1209 = vmatpush1.msra.mxu0 0.0
  %1210 = vmatprep.subr.mxu0 0.0
  %1211 = vmatpush1.msra.mxu0 0.0
  %1212 = vmatprep.subr.mxu0 0.0
  %1213 = vmatpush1.msra.mxu0 0.0
  %1214 = vmatprep.subr.mxu0 0.0
  %1215 = vmatpush1.msra.mxu0 0.0
  %1216 = vmatprep.subr.mxu0 0.0
  %1217 = vmatpush1.msra.mxu0 0.0
  %1218 = vmatprep.subr.mxu0 0.0
  %1219 = vmatpush1.msra.mxu0 0.0
  %1220 = vmatprep.subr.mxu0 0.0
  %1221 = vmatpush1.msra.mxu0 0.0
  %1222 = vmatprep.subr.mxu0 0.0
  %1223 = vmatpush1.msra.mxu0 0.0
  %1224 = vmatprep.subr.mxu0 0.0
  %1225 = vmatpush1.msra.mxu0 0.0
  %1226 = vmatprep.subr.mxu0 0.0
  %1227 = vmatpush1.msra.mxu0 0.0
  %1228 = vmatprep.subr.mxu0 0.0
  %1229 = vmatpush1.msra.mxu0 0.0
  %1230 = vmatprep.mubr.f32.mxu0 0.0
  %1231 = vmatmul.mubr.f32.gmra.mrb[0].mxu0 %v1164
  %v1232 = vpop.f32.mrb[0].mxu0
  %v1233 = vadd.f32 0.0, %v1232
  %v1234 = vpop.f32.mrb[0].mxu0
  %1235 = vdwg.mxu0
  %1236 = vrot.lane.b32.xlu0 %v142, 48
  %v1237 = vpop.permute.xlu0 %1236
  %v1240 = vsel %vm148, %v853, 0
  %1242 = vmatprep.subr.mxu0 0.0
  %1243 = vmatpush1.msra.mxu0 %v1237
  %1244 = vmatprep.subr.mxu0 0.0
  %1245 = vmatpush1.msra.mxu0 0.0
  %1246 = vmatprep.subr.mxu0 0.0
  %1247 = vmatpush1.msra.mxu0 0.0
  %1248 = vmatprep.subr.mxu0 0.0
  %1249 = vmatpush1.msra.mxu0 0.0
  %1250 = vmatprep.subr.mxu0 0.0
  %1251 = vmatpush1.msra.mxu0 0.0
  %1252 = vmatprep.subr.mxu0 0.0
  %1253 = vmatpush1.msra.mxu0 0.0
  %1254 = vmatprep.subr.mxu0 0.0
  %1255 = vmatpush1.msra.mxu0 0.0
  %1256 = vmatprep.subr.mxu0 0.0
  %1257 = vmatpush1.msra.mxu0 0.0
  %1258 = vmatprep.subr.mxu0 0.0
  %1259 = vmatpush1.msra.mxu0 0.0
  %1260 = vmatprep.subr.mxu0 0.0
  %1261 = vmatpush1.msra.mxu0 0.0
  %1262 = vmatprep.subr.mxu0 0.0
  %1263 = vmatpush1.msra.mxu0 0.0
  %1264 = vmatprep.subr.mxu0 0.0
  %1265 = vmatpush1.msra.mxu0 0.0
  %1266 = vmatprep.subr.mxu0 0.0
  %1267 = vmatpush1.msra.mxu0 0.0
  %1268 = vmatprep.subr.mxu0 0.0
  %1269 = vmatpush1.msra.mxu0 0.0
  %1270 = vmatprep.subr.mxu0 0.0
  %1271 = vmatpush1.msra.mxu0 0.0
  %1272 = vmatprep.subr.mxu0 0.0
  %1273 = vmatpush1.msra.mxu0 0.0
  %1274 = vmatprep.subr.mxu0 0.0
  %1275 = vmatpush1.msra.mxu0 0.0
  %1276 = vmatprep.subr.mxu0 0.0
  %1277 = vmatpush1.msra.mxu0 0.0
  %1278 = vmatprep.subr.mxu0 0.0
  %1279 = vmatpush1.msra.mxu0 0.0
  %1280 = vmatprep.subr.mxu0 0.0
  %1281 = vmatpush1.msra.mxu0 0.0
  %1282 = vmatprep.subr.mxu0 0.0
  %1283 = vmatpush1.msra.mxu0 0.0
  %1284 = vmatprep.subr.mxu0 0.0
  %1285 = vmatpush1.msra.mxu0 0.0
  %1286 = vmatprep.subr.mxu0 0.0
  %1287 = vmatpush1.msra.mxu0 0.0
  %1288 = vmatprep.subr.mxu0 0.0
  %1289 = vmatpush1.msra.mxu0 0.0
  %1290 = vmatprep.subr.mxu0 0.0
  %1291 = vmatpush1.msra.mxu0 0.0
  %1292 = vmatprep.subr.mxu0 0.0
  %1293 = vmatpush1.msra.mxu0 0.0
  %1294 = vmatprep.subr.mxu0 0.0
  %1295 = vmatpush1.msra.mxu0 0.0
  %1296 = vmatprep.subr.mxu0 0.0
  %1297 = vmatpush1.msra.mxu0 0.0
  %1298 = vmatprep.subr.mxu0 0.0
  %1299 = vmatpush1.msra.mxu0 0.0
  %1300 = vmatprep.subr.mxu0 0.0
  %1301 = vmatpush1.msra.mxu0 0.0
  %1302 = vmatprep.subr.mxu0 0.0
  %1303 = vmatpush1.msra.mxu0 0.0
  %1304 = vmatprep.subr.mxu0 0.0
  %1305 = vmatpush1.msra.mxu0 0.0
  %1306 = vmatprep.mubr.f32.mxu0 0.0
  %1307 = vmatmul.mubr.f32.gmra.mrb[0].mxu0 %v1240
  %v1308 = vpop.f32.mrb[0].mxu0
  %v1309 = vadd.f32 0.0, %v1308
  %v1310 = vpop.f32.mrb[0].mxu0
  %1311 = vdwg.mxu0
  %1312 = vrot.lane.b32.xlu0 %v137, 40
  %v1313 = vpop.permute.xlu0 %1312
  %v1316 = vsel %vm148, %v854, 0
  %1318 = vmatprep.subr.mxu0 0.0
  %1319 = vmatpush1.msra.mxu0 %v1313
  %1320 = vmatprep.subr.mxu0 0.0
  %1321 = vmatpush1.msra.mxu0 0.0
  %1322 = vmatprep.subr.mxu0 0.0
  %1323 = vmatpush1.msra.mxu0 0.0
  %1324 = vmatprep.subr.mxu0 0.0
  %1325 = vmatpush1.msra.mxu0 0.0
  %1326 = vmatprep.subr.mxu0 0.0
  %1327 = vmatpush1.msra.mxu0 0.0
  %1328 = vmatprep.subr.mxu0 0.0
  %1329 = vmatpush1.msra.mxu0 0.0
  %1330 = vmatprep.subr.mxu0 0.0
  %1331 = vmatpush1.msra.mxu0 0.0
  %1332 = vmatprep.subr.mxu0 0.0
  %1333 = vmatpush1.msra.mxu0 0.0
  %1334 = vmatprep.subr.mxu0 0.0
  %1335 = vmatpush1.msra.mxu0 0.0
  %1336 = vmatprep.subr.mxu0 0.0
  %1337 = vmatpush1.msra.mxu0 0.0
  %1338 = vmatprep.subr.mxu0 0.0
  %1339 = vmatpush1.msra.mxu0 0.0
  %1340 = vmatprep.subr.mxu0 0.0
  %1341 = vmatpush1.msra.mxu0 0.0
  %1342 = vmatprep.subr.mxu0 0.0
  %1343 = vmatpush1.msra.mxu0 0.0
  %1344 = vmatprep.subr.mxu0 0.0
  %1345 = vmatpush1.msra.mxu0 0.0
  %1346 = vmatprep.subr.mxu0 0.0
  %1347 = vmatpush1.msra.mxu0 0.0
  %1348 = vmatprep.subr.mxu0 0.0
  %1349 = vmatpush1.msra.mxu0 0.0
  %1350 = vmatprep.subr.mxu0 0.0
  %1351 = vmatpush1.msra.mxu0 0.0
  %1352 = vmatprep.subr.mxu0 0.0
  %1353 = vmatpush1.msra.mxu0 0.0
  %1354 = vmatprep.subr.mxu0 0.0
  %1355 = vmatpush1.msra.mxu0 0.0
  %1356 = vmatprep.subr.mxu0 0.0
  %1357 = vmatpush1.msra.mxu0 0.0
  %1358 = vmatprep.subr.mxu0 0.0
  %1359 = vmatpush1.msra.mxu0 0.0
  %1360 = vmatprep.subr.mxu0 0.0
  %1361 = vmatpush1.msra.mxu0 0.0
  %1362 = vmatprep.subr.mxu0 0.0
  %1363 = vmatpush1.msra.mxu0 0.0
  %1364 = vmatprep.subr.mxu0 0.0
  %1365 = vmatpush1.msra.mxu0 0.0
  %1366 = vmatprep.subr.mxu0 0.0
  %1367 = vmatpush1.msra.mxu0 0.0
  %1368 = vmatprep.subr.mxu0 0.0
  %1369 = vmatpush1.msra.mxu0 0.0
  %1370 = vmatprep.subr.mxu0 0.0
  %1371 = vmatpush1.msra.mxu0 0.0
  %1372 = vmatprep.subr.mxu0 0.0
  %1373 = vmatpush1.msra.mxu0 0.0
  %1374 = vmatprep.subr.mxu0 0.0
  %1375 = vmatpush1.msra.mxu0 0.0
  %1376 = vmatprep.subr.mxu0 0.0
  %1377 = vmatpush1.msra.mxu0 0.0
  %1378 = vmatprep.subr.mxu0 0.0
  %1379 = vmatpush1.msra.mxu0 0.0
  %1380 = vmatprep.subr.mxu0 0.0
  %1381 = vmatpush1.msra.mxu0 0.0
  %1382 = vmatprep.mubr.f32.mxu0 0.0
  %1383 = vmatmul.mubr.f32.gmra.mrb[0].mxu0 %v1316
  %v1384 = vpop.f32.mrb[0].mxu0
  %v1385 = vadd.f32 0.0, %v1384
  %v1386 = vpop.f32.mrb[0].mxu0
  %1387 = vdwg.mxu0
  %1388 = vrot.lane.b32.xlu0 %v142, 40
  %v1389 = vpop.permute.xlu0 %1388
  %v1392 = vsel %vm148, %v855, 0
  %1394 = vmatprep.subr.mxu0 0.0
  %1395 = vmatpush1.msra.mxu0 %v1389
  %1396 = vmatprep.subr.mxu0 0.0
  %1397 = vmatpush1.msra.mxu0 0.0
  %1398 = vmatprep.subr.mxu0 0.0
  %1399 = vmatpush1.msra.mxu0 0.0
  %1400 = vmatprep.subr.mxu0 0.0
  %1401 = vmatpush1.msra.mxu0 0.0
  %1402 = vmatprep.subr.mxu0 0.0
  %1403 = vmatpush1.msra.mxu0 0.0
  %1404 = vmatprep.subr.mxu0 0.0
  %1405 = vmatpush1.msra.mxu0 0.0
  %1406 = vmatprep.subr.mxu0 0.0
  %1407 = vmatpush1.msra.mxu0 0.0
  %1408 = vmatprep.subr.mxu0 0.0
  %1409 = vmatpush1.msra.mxu0 0.0
  %1410 = vmatprep.subr.mxu0 0.0
  %1411 = vmatpush1.msra.mxu0 0.0
  %1412 = vmatprep.subr.mxu0 0.0
  %1413 = vmatpush1.msra.mxu0 0.0
  %1414 = vmatprep.subr.mxu0 0.0
  %1415 = vmatpush1.msra.mxu0 0.0
  %1416 = vmatprep.subr.mxu0 0.0
  %1417 = vmatpush1.msra.mxu0 0.0
  %1418 = vmatprep.subr.mxu0 0.0
  %1419 = vmatpush1.msra.mxu0 0.0
  %1420 = vmatprep.subr.mxu0 0.0
  %1421 = vmatpush1.msra.mxu0 0.0
  %1422 = vmatprep.subr.mxu0 0.0
  %1423 = vmatpush1.msra.mxu0 0.0
  %1424 = vmatprep.subr.mxu0 0.0
  %1425 = vmatpush1.msra.mxu0 0.0
  %1426 = vmatprep.subr.mxu0 0.0
  %1427 = vmatpush1.msra.mxu0 0.0
  %1428 = vmatprep.subr.mxu0 0.0
  %1429 = vmatpush1.msra.mxu0 0.0
  %1430 = vmatprep.subr.mxu0 0.0
  %1431 = vmatpush1.msra.mxu0 0.0
  %1432 = vmatprep.subr.mxu0 0.0
  %1433 = vmatpush1.msra.mxu0 0.0
  %1434 = vmatprep.subr.mxu0 0.0
  %1435 = vmatpush1.msra.mxu0 0.0
  %1436 = vmatprep.subr.mxu0 0.0
  %1437 = vmatpush1.msra.mxu0 0.0
  %1438 = vmatprep.subr.mxu0 0.0
  %1439 = vmatpush1.msra.mxu0 0.0
  %1440 = vmatprep.subr.mxu0 0.0
  %1441 = vmatpush1.msra.mxu0 0.0
  %1442 = vmatprep.subr.mxu0 0.0
  %1443 = vmatpush1.msra.mxu0 0.0
  %1444 = vmatprep.subr.mxu0 0.0
  %1445 = vmatpush1.msra.mxu0 0.0
  %1446 = vmatprep.subr.mxu0 0.0
  %1447 = vmatpush1.msra.mxu0 0.0
  %1448 = vmatprep.subr.mxu0 0.0
  %1449 = vmatpush1.msra.mxu0 0.0
  %1450 = vmatprep.subr.mxu0 0.0
  %1451 = vmatpush1.msra.mxu0 0.0
  %1452 = vmatprep.subr.mxu0 0.0
  %1453 = vmatpush1.msra.mxu0 0.0
  %1454 = vmatprep.subr.mxu0 0.0
  %1455 = vmatpush1.msra.mxu0 0.0
  %1456 = vmatprep.subr.mxu0 0.0
  %1457 = vmatpush1.msra.mxu0 0.0
  %1458 = vmatprep.mubr.f32.mxu0 0.0
  %1459 = vmatmul.mubr.f32.gmra.mrb[0].mxu0 %v1392
  %v1460 = vpop.f32.mrb[0].mxu0
  %v1461 = vadd.f32 0.0, %v1460
  %v1462 = vpop.f32.mrb[0].mxu0
  %1463 = vdwg.mxu0
  %1466 = vrot.lane.b32.xlu0 %v1081, 8
  %v1467 = vpop.permute.xlu0 %1466
  %1468 = vrot.lane.b32.xlu0 %v1157, 8
  %v1469 = vpop.permute.xlu0 %1468
  %1474 = vrot.lane.b32.xlu0 %v1233, 16
  %v1475 = vpop.permute.xlu0 %1474
  %1476 = vrot.lane.b32.xlu0 %v1309, 16
  %v1477 = vpop.permute.xlu0 %1476
  %1482 = vrot.lane.b32.xlu0 %v1385, 24
  %v1483 = vpop.permute.xlu0 %1482
  %1484 = vrot.lane.b32.xlu0 %v1461, 24
  %v1485 = vpop.permute.xlu0 %1484
  %v1488 = vsel %vm148, %v929, %v1467
  %v1489 = vsel %vm148, %v1005, %v1469
  %vm1490 = vcmask 130048
  %v1491 = vsel %vm1490, %v1488, %v1475
  %v1492 = vsel %vm1490, %v1489, %v1477
  %vm1493 = vcmask 195584
  %v1494 = vsel %vm1493, %v1491, %v1483
  %v1495 = vsel %vm1493, %v1492, %v1485
  %v1496 = vld [vmem:[%s5 + $0x3] ss:$0 sm:$0xff]
  %v1497 = vld [vmem:[%s2] sm:$0xff]
  %v1498 = vld [vmem:[%s2 + $0x8] sm:$0xff]
  %v1499 = vld [vmem:[%s2 + $0x10] sm:$0xff]
  %v1500 = vld [vmem:[%s2 + $0x18] sm:$0xff]
  %v1502 = vsel %vm27, %v1494, 0
  %v1505 = vsel %vm27, %v1495, 0
  %1507 = vmatprep.subr.mxu0 0.0
  %1508 = vmatpush1.msra.mxu0 %v1497
  %1509 = vmatprep.subr.mxu0 0.0
  %1510 = vmatpush1.msra.mxu0 %v1498
  %1511 = vmatprep.subr.mxu0 0.0
  %1512 = vmatpush1.msra.mxu0 %v1499
  %1513 = vmatprep.subr.mxu0 0.0
  %1514 = vmatpush1.msra.mxu0 %v1500
  %1515 = vmatprep.subr.mxu0 0.0
  %1516 = vmatpush1.msra.mxu0 0.0
  %1517 = vmatprep.subr.mxu0 0.0
  %1518 = vmatpush1.msra.mxu0 0.0
  %1519 = vmatprep.subr.mxu0 0.0
  %1520 = vmatpush1.msra.mxu0 0.0
  %1521 = vmatprep.subr.mxu0 0.0
  %1522 = vmatpush1.msra.mxu0 0.0
  %1523 = vmatprep.subr.mxu0 0.0
  %1524 = vmatpush1.msra.mxu0 0.0
  %1525 = vmatprep.subr.mxu0 0.0
  %1526 = vmatpush1.msra.mxu0 0.0
  %1527 = vmatprep.subr.mxu0 0.0
  %1528 = vmatpush1.msra.mxu0 0.0
  %1529 = vmatprep.subr.mxu0 0.0
  %1530 = vmatpush1.msra.mxu0 0.0
  %1531 = vmatprep.subr.mxu0 0.0
  %1532 = vmatpush1.msra.mxu0 0.0
  %1533 = vmatprep.subr.mxu0 0.0
  %1534 = vmatpush1.msra.mxu0 0.0
  %1535 = vmatprep.subr.mxu0 0.0
  %1536 = vmatpush1.msra.mxu0 0.0
  %1537 = vmatprep.subr.mxu0 0.0
  %1538 = vmatpush1.msra.mxu0 0.0
  %1539 = vmatprep.subr.mxu0 0.0
  %1540 = vmatpush1.msra.mxu0 0.0
  %1541 = vmatprep.subr.mxu0 0.0
  %1542 = vmatpush1.msra.mxu0 0.0
  %1543 = vmatprep.subr.mxu0 0.0
  %1544 = vmatpush1.msra.mxu0 0.0
  %1545 = vmatprep.subr.mxu0 0.0
  %1546 = vmatpush1.msra.mxu0 0.0
  %1547 = vmatprep.subr.mxu0 0.0
  %1548 = vmatpush1.msra.mxu0 0.0
  %1549 = vmatprep.subr.mxu0 0.0
  %1550 = vmatpush1.msra.mxu0 0.0
  %1551 = vmatprep.subr.mxu0 0.0
  %1552 = vmatpush1.msra.mxu0 0.0
  %1553 = vmatprep.subr.mxu0 0.0
  %1554 = vmatpush1.msra.mxu0 0.0
  %1555 = vmatprep.subr.mxu0 0.0
  %1556 = vmatpush1.msra.mxu0 0.0
  %1557 = vmatprep.subr.mxu0 0.0
  %1558 = vmatpush1.msra.mxu0 0.0
  %1559 = vmatprep.subr.mxu0 0.0
  %1560 = vmatpush1.msra.mxu0 0.0
  %1561 = vmatprep.subr.mxu0 0.0
  %1562 = vmatpush1.msra.mxu0 0.0
  %1563 = vmatprep.subr.mxu0 0.0
  %1564 = vmatpush1.msra.mxu0 0.0
  %1565 = vmatprep.subr.mxu0 0.0
  %1566 = vmatpush1.msra.mxu0 0.0
  %1567 = vmatprep.subr.mxu0 0.0
  %1568 = vmatpush1.msra.mxu0 0.0
  %1569 = vmatprep.subr.mxu0 0.0
  %1570 = vmatpush1.msra.mxu0 0.0
  %1571 = vmatprep.mubr.f32.mxu0 0.0
  %1572 = vmatmul.mubr.f32.gmra.mrb[0].mxu0 %v1502
  %v1573 = vpop.f32.mrb[0].mxu0
  %v1574 = vadd.f32 %v1496, %v1573
  %v1575 = vpop.f32.mrb[0].mxu0
  %1576 = vmatprep.mubr.f32.mxu0 0.0
  %1577 = vmatmul.mubr.f32.gmra.mrb[0].mxu0 %v1505
  %v1578 = vpop.f32.mrb[0].mxu0
  %v1579 = vadd.f32 %v1496, %v1578
  %v1580 = vpop.f32.mrb[0].mxu0
  %1581 = vdwg.mxu0
  %v1582 = vadd.f32 %v23, %v1574
  %v1583 = vadd.f32 %v24, %v1579
  %v1584 = vld [vmem:[%s5 + $0x4] ss:$0 sm:$0xff]
  %v1585 = vld [vmem:[%s5 + $0x5] ss:$0 sm:$0xff]
  %v1586 = vsel %vm27, %v1582, 0.0
  %1587 = vadd.xlane.f32.xlu0 %v1586
  %v1588 = vpop.xlane.xlu0 %1587
  %v1589 = vsel %vm27, %v1583, 0.0
  %1590 = vadd.xlane.f32.xlu0 %v1589
  %v1591 = vpop.xlane.xlu0 %1590
  %v1592 = vmul.f32 %v1588, %v34
  %v1593 = vmul.f32 %v1591, %v34
  %v1594 = vsub.f32 %v1582, %v1592
  %v1595 = vsub.f32 %v1583, %v1593
  %v1596 = vmul.f32 %v1594, %v1594
  %v1597 = vmul.f32 %v1595, %v1595
  %v1598 = vsel %vm27, %v1596, 0.0
  %1599 = vadd.xlane.f32.xlu0 %v1598
  %v1600 = vpop.xlane.xlu0 %1599
  %v1601 = vsel %vm27, %v1597, 0.0
  %1602 = vadd.xlane.f32.xlu0 %v1601
  %v1603 = vpop.xlane.xlu0 %1602
  %v1604 = vmul.f32 %v1600, %v34
  %v1605 = vmul.f32 %v1603, %v34
  %v1606 = vadd.f32 %v1604, 1e-05
  %v1607 = vadd.f32 %v1605, 1e-05
  %v1608 = vrsqrt.pop %v1606
  %v1609 = vrsqrt.pop %v1607
  %v1610 = vmul.f32 %v1594, %v1608
  %v1611 = vmul.f32 %v1595, %v1609
  %v1612 = vmul.f32 %v1610, %v1584
  %v1613 = vmul.f32 %v1611, %v1584
  %v1614 = vadd.f32 %v1612, %v1585
  %v1615 = vadd.f32 %v1613, %v1585
  %s1616 = scalar_lea.vmem %s5, 6
  %v1617 = vld [vmem:[%s1616] ss:$8 sm:$0x7]
  %v1618 = vld [vmem:[%s3] sm:$0xff]
  %v1619 = vld [vmem:[%s3 + $0x8] sm:$0xff]
  %v1620 = vld [vmem:[%s3 + $0x10] sm:$0xff]
  %v1621 = vld [vmem:[%s3 + $0x18] sm:$0xff]
  %v1622 = vld [vmem:[%s3 + $0x20] sm:$0xff]
  %v1623 = vld [vmem:[%s3 + $0x28] sm:$0xff]
  %v1624 = vld [vmem:[%s3 + $0x30] sm:$0xff]
  %v1625 = vld [vmem:[%s3 + $0x38] sm:$0xff]
  %v1626 = vld [vmem:[%s3 + $0x40] sm:$0xff]
  %v1627 = vld [vmem:[%s3 + $0x48] sm:$0xff]
  %v1628 = vld [vmem:[%s3 + $0x50] sm:$0xff]
  %v1629 = vld [vmem:[%s3 + $0x58] sm:$0xff]
  %v1631 = vlaneseq
  %v1632 = vshrl.u32 %v1631, 7
  %v1633 = vsub.s32 0, %v1632
  %v1634 = vrot.slane %v1617, %v1633
  %v1635 = vlaneseq
  %v1636 = vshrl.u32 %v1635, 7
  %v1637 = vsub.s32 1, %v1636
  %v1638 = vrot.slane %v1617, %v1637
  %v1639 = vlaneseq
  %v1640 = vshrl.u32 %v1639, 7
  %v1641 = vsub.s32 2, %v1640
  %v1642 = vrot.slane %v1617, %v1641
  %v1647 = vsel %vm27, %v1614, 0
  %v1650 = vsel %vm27, %v1615, 0
  %1652 = vmatprep.subr.mxu0 %v1619
  %1653 = vmatpush1.msra.mxu0 %v1618
  %1654 = vmatprep.subr.mxu0 %v1622
  %1655 = vmatpush1.msra.mxu0 %v1621
  %1656 = vmatprep.subr.mxu0 %v1625
  %1657 = vmatpush1.msra.mxu0 %v1624
  %1658 = vmatprep.subr.mxu0 %v1628
  %1659 = vmatpush1.msra.mxu0 %v1627
  %1660 = vmatprep.subr.mxu0 0.0
  %1661 = vmatpush1.msra.mxu0 0.0
  %1662 = vmatprep.subr.mxu0 0.0
  %1663 = vmatpush1.msra.mxu0 0.0
  %1664 = vmatprep.subr.mxu0 0.0
  %1665 = vmatpush1.msra.mxu0 0.0
  %1666 = vmatprep.subr.mxu0 0.0
  %1667 = vmatpush1.msra.mxu0 0.0
  %1668 = vmatprep.subr.mxu0 0.0
  %1669 = vmatpush1.msra.mxu0 0.0
  %1670 = vmatprep.subr.mxu0 0.0
  %1671 = vmatpush1.msra.mxu0 0.0
  %1672 = vmatprep.subr.mxu0 0.0
  %1673 = vmatpush1.msra.mxu0 0.0
  %1674 = vmatprep.subr.mxu0 0.0
  %1675 = vmatpush1.msra.mxu0 0.0
  %1676 = vmatprep.subr.mxu0 0.0
  %1677 = vmatpush1.msra.mxu0 0.0
  %1678 = vmatprep.subr.mxu0 0.0
  %1679 = vmatpush1.msra.mxu0 0.0
  %1680 = vmatprep.subr.mxu0 0.0
  %1681 = vmatpush1.msra.mxu0 0.0
  %1682 = vmatprep.subr.mxu0 0.0
  %1683 = vmatpush1.msra.mxu0 0.0
  %1684 = vmatprep.subr.mxu0 0.0
  %1685 = vmatpush1.msra.mxu0 0.0
  %1686 = vmatprep.subr.mxu0 0.0
  %1687 = vmatpush1.msra.mxu0 0.0
  %1688 = vmatprep.subr.mxu0 0.0
  %1689 = vmatpush1.msra.mxu0 0.0
  %1690 = vmatprep.subr.mxu0 0.0
  %1691 = vmatpush1.msra.mxu0 0.0
  %1692 = vmatprep.subr.mxu0 0.0
  %1693 = vmatpush1.msra.mxu0 0.0
  %1694 = vmatprep.subr.mxu0 0.0
  %1695 = vmatpush1.msra.mxu0 0.0
  %1696 = vmatprep.subr.mxu0 0.0
  %1697 = vmatpush1.msra.mxu0 0.0
  %1698 = vmatprep.subr.mxu0 0.0
  %1699 = vmatpush1.msra.mxu0 0.0
  %1700 = vmatprep.subr.mxu0 0.0
  %1701 = vmatpush1.msra.mxu0 0.0
  %1702 = vmatprep.subr.mxu0 0.0
  %1703 = vmatpush1.msra.mxu0 0.0
  %1704 = vmatprep.subr.mxu0 0.0
  %1705 = vmatpush1.msra.mxu0 0.0
  %1706 = vmatprep.subr.mxu0 0.0
  %1707 = vmatpush1.msra.mxu0 0.0
  %1708 = vmatprep.subr.mxu0 0.0
  %1709 = vmatpush1.msra.mxu0 0.0
  %1710 = vmatprep.subr.mxu0 0.0
  %1711 = vmatpush1.msra.mxu0 0.0
  %1712 = vmatprep.subr.mxu0 0.0
  %1713 = vmatpush1.msra.mxu0 0.0
  %1714 = vmatprep.subr.mxu0 0.0
  %1715 = vmatpush1.msra.mxu0 0.0
  %1716 = vmatprep.mubr.f32.mxu0 0.0
  %1717 = vmatmul.mubr.f32.gmra.mrb[0].mxu0 %v1647
  %v1718 = vpop.f32.mrb[0].mxu0
  %v1719 = vadd.f32 %v1634, %v1718
  %v1720 = vpop.f32.mrb[0].mxu0
  %v1721 = vadd.f32 %v1638, %v1720
  %1722 = vmatprep.mubr.f32.mxu0 0.0
  %1723 = vmatmul.mubr.f32.gmra.mrb[0].mxu0 %v1650
  %v1724 = vpop.f32.mrb[0].mxu0
  %v1725 = vadd.f32 %v1634, %v1724
  %v1726 = vpop.f32.mrb[0].mxu0
  %v1727 = vadd.f32 %v1638, %v1726
  %1728 = vdwg.mxu0
  %1729 = vmatprep.subr.mxu0 0.0
  %1730 = vmatpush1.msra.mxu0 %v1620
  %1731 = vmatprep.subr.mxu0 0.0
  %1732 = vmatpush1.msra.mxu0 %v1623
  %1733 = vmatprep.subr.mxu0 0.0
  %1734 = vmatpush1.msra.mxu0 %v1626
  %1735 = vmatprep.subr.mxu0 0.0
  %1736 = vmatpush1.msra.mxu0 %v1629
  %1737 = vmatprep.subr.mxu0 0.0
  %1738 = vmatpush1.msra.mxu0 0.0
  %1739 = vmatprep.subr.mxu0 0.0
  %1740 = vmatpush1.msra.mxu0 0.0
  %1741 = vmatprep.subr.mxu0 0.0
  %1742 = vmatpush1.msra.mxu0 0.0
  %1743 = vmatprep.subr.mxu0 0.0
  %1744 = vmatpush1.msra.mxu0 0.0
  %1745 = vmatprep.subr.mxu0 0.0
  %1746 = vmatpush1.msra.mxu0 0.0
  %1747 = vmatprep.subr.mxu0 0.0
  %1748 = vmatpush1.msra.mxu0 0.0
  %1749 = vmatprep.subr.mxu0 0.0
  %1750 = vmatpush1.msra.mxu0 0.0
  %1751 = vmatprep.subr.mxu0 0.0
  %1752 = vmatpush1.msra.mxu0 0.0
  %1753 = vmatprep.subr.mxu0 0.0
  %1754 = vmatpush1.msra.mxu0 0.0
  %1755 = vmatprep.subr.mxu0 0.0
  %1756 = vmatpush1.msra.mxu0 0.0
  %1757 = vmatprep.subr.mxu0 0.0
  %1758 = vmatpush1.msra.mxu0 0.0
  %1759 = vmatprep.subr.mxu0 0.0
  %1760 = vmatpush1.msra.mxu0 0.0
  %1761 = vmatprep.subr.mxu0 0.0
  %1762 = vmatpush1.msra.mxu0 0.0
  %1763 = vmatprep.subr.mxu0 0.0
  %1764 = vmatpush1.msra.mxu0 0.0
  %1765 = vmatprep.subr.mxu0 0.0
  %1766 = vmatpush1.msra.mxu0 0.0
  %1767 = vmatprep.subr.mxu0 0.0
  %1768 = vmatpush1.msra.mxu0 0.0
  %1769 = vmatprep.subr.mxu0 0.0
  %1770 = vmatpush1.msra.mxu0 0.0
  %1771 = vmatprep.subr.mxu0 0.0
  %1772 = vmatpush1.msra.mxu0 0.0
  %1773 = vmatprep.subr.mxu0 0.0
  %1774 = vmatpush1.msra.mxu0 0.0
  %1775 = vmatprep.subr.mxu0 0.0
  %1776 = vmatpush1.msra.mxu0 0.0
  %1777 = vmatprep.subr.mxu0 0.0
  %1778 = vmatpush1.msra.mxu0 0.0
  %1779 = vmatprep.subr.mxu0 0.0
  %1780 = vmatpush1.msra.mxu0 0.0
  %1781 = vmatprep.subr.mxu0 0.0
  %1782 = vmatpush1.msra.mxu0 0.0
  %1783 = vmatprep.subr.mxu0 0.0
  %1784 = vmatpush1.msra.mxu0 0.0
  %1785 = vmatprep.subr.mxu0 0.0
  %1786 = vmatpush1.msra.mxu0 0.0
  %1787 = vmatprep.subr.mxu0 0.0
  %1788 = vmatpush1.msra.mxu0 0.0
  %1789 = vmatprep.subr.mxu0 0.0
  %1790 = vmatpush1.msra.mxu0 0.0
  %1791 = vmatprep.subr.mxu0 0.0
  %1792 = vmatpush1.msra.mxu0 0.0
  %1793 = vmatprep.mubr.f32.mxu0 0.0
  %1794 = vmatmul.mubr.f32.gmra.mrb[0].mxu0 %v1647
  %v1795 = vpop.f32.mrb[0].mxu0
  %v1796 = vadd.f32 %v1642, %v1795
  %v1797 = vpop.f32.mrb[0].mxu0
  %1798 = vmatprep.mubr.f32.mxu0 0.0
  %1799 = vmatmul.mubr.f32.gmra.mrb[0].mxu0 %v1650
  %v1800 = vpop.f32.mrb[0].mxu0
  %v1801 = vadd.f32 %v1642, %v1800
  %v1802 = vpop.f32.mrb[0].mxu0
  %1803 = vdwg.mxu0
  %vm1804 = vcmask 556544
  %v1805 = vsel %vm1804, %v1796, -inf
  %1806 = vmax.xlane.f32.xlu0 %v1805
  %v1807 = vpop.xlane.xlu0 %1806
  %v1808 = vsel %vm1804, %v1801, -inf
  %1809 = vmax.xlane.f32.xlu0 %v1808
  %v1810 = vpop.xlane.xlu0 %1809
  %v1811 = vsub.f32 %v1796, %v1807
  %v1812 = vsub.f32 %v1801, %v1810
  %v1813 = vmul.f32 %v1811, 1.442695
  %v1814 = vpow.pop %v1813
  %v1815 = vmul.f32 %v1812, 1.442695
  %v1816 = vpow.pop %v1815
  %1819 = vrot.lane.b32.xlu0 %v1814, 64
  %v1820 = vpop.permute.xlu0 %1819
  %1821 = vrot.lane.b32.xlu0 %v1816, 64
  %v1822 = vpop.permute.xlu0 %1821
  %vm1825 = vcmask 31744
  %v1826 = vsel %vm1825, %v1820, 0.0
  %1827 = vadd.xlane.f32.xlu0 %v1826
  %v1828 = vpop.xlane.xlu0 %1827
  %v1829 = vsel %vm1825, %v1822, 0.0
  %1830 = vadd.xlane.f32.xlu0 %v1829
  %v1831 = vpop.xlane.xlu0 %1830
  %v1832 = vrcp.pop %v1828
  %v1833 = vrcp.pop %v1831
  %v1834 = vmul.f32 %v1814, %v1832
  %v1835 = vmul.f32 %v1816, %v1833
  %v1836 = vlaneseq
  %v1837 = vand.u32 %v1836, 127
  %v1838 = vsel %vm1804, %v1834, -inf
  %1839 = vmax.xlane.f32.xlu0 %v1838
  %v1840 = vpop.xlane.xlu0 %1839
  %v1841 = vsel %vm1804, %v1835, -inf
  %1842 = vmax.xlane.f32.xlu0 %v1841
  %v1843 = vpop.xlane.xlu0 %1842
  %vm1844 = vcmp.eq.f32.partialorder %v1834, %v1840
  %vm1845 = vcmp.eq.f32.partialorder %v1835, %v1843
  %1846 = vrot.lane.b32.xlu0 %v1837, 64
  %v1847 = vpop.permute.xlu0 %1846
  %v1848 = vsel %vm1844, %v1847, 4
  %v1849 = vsel %vm1845, %v1847, 4
  %v1850 = vsel %vm1804, %v1848, 2147483647
  %v1851 = vand.u32 %v1850, 65535
  %v1852 = vshra.s32 %v1850, 16
  %v1853 = vcvt.s32.f32 %v1851
  %v1854 = vcvt.s32.f32 %v1852
  %1855 = vmin.xlane.f32.xlu0 %v1854
  %v1856 = vpop.xlane.xlu0 %1855
  %vm1857 = vcmp.eq.f32.partialorder %v1854, %v1856
  %v1858 = vsel %vm1857, %v1853, inf
  %1859 = vmin.xlane.f32.xlu0 %v1858
  %v1860 = vpop.xlane.xlu0 %1859
  %v1861 = vcvt.f32.s32 %v1860
  %v1862 = vcvt.f32.s32 %v1856
  %v1863 = vshll.u32 %v1862, 16
  %v1864 = vadd.s32 %v1863, %v1861
  %v1865 = vsel %vm1804, %v1849, 2147483647
  %v1866 = vand.u32 %v1865, 65535
  %v1867 = vshra.s32 %v1865, 16
  %v1868 = vcvt.s32.f32 %v1866
  %v1869 = vcvt.s32.f32 %v1867
  %1870 = vmin.xlane.f32.xlu0 %v1869
  %v1871 = vpop.xlane.xlu0 %1870
  %vm1872 = vcmp.eq.f32.partialorder %v1869, %v1871
  %v1873 = vsel %vm1872, %v1868, inf
  %1874 = vmin.xlane.f32.xlu0 %v1873
  %v1875 = vpop.xlane.xlu0 %1874
  %v1876 = vcvt.f32.s32 %v1875
  %v1877 = vcvt.f32.s32 %v1871
  %v1878 = vshll.u32 %v1877, 16
  %v1879 = vadd.s32 %v1878, %v1876
  %vm1880 = vcmp.eq.s32.totalorder %v1837, %v1864
  %vm1881 = vcmp.eq.s32.totalorder %v1837, %v1879
  %1884 = vrot.lane.b32.xlu0 %v1834, 64
  %v1885 = vpop.permute.xlu0 %1884
  %1886 = vrot.lane.b32.xlu0 %v1835, 64
  %v1887 = vpop.permute.xlu0 %1886
  %v1890 = vsel %vm1880, %v1885, 0.0
  %v1891 = vsel %vm1881, %v1887, 0.0
  %v1892 = vsel %vm1880, -inf, %v1885
  %v1893 = vsel %vm1881, -inf, %v1887
  %v1894 = vsel %vm1825, %v1892, -inf
  %1895 = vmax.xlane.f32.xlu0 %v1894
  %v1896 = vpop.xlane.xlu0 %1895
  %v1897 = vsel %vm1825, %v1893, -inf
  %1898 = vmax.xlane.f32.xlu0 %v1897
  %v1899 = vpop.xlane.xlu0 %1898
  %vm1900 = vcmp.eq.f32.partialorder %v1892, %v1896
  %vm1901 = vcmp.eq.f32.partialorder %v1893, %v1899
  %v1902 = vsel %vm1900, %v1837, 4
  %v1903 = vsel %vm1901, %v1837, 4
  %v1904 = vsel %vm1825, %v1902, 2147483647
  %v1905 = vand.u32 %v1904, 65535
  %v1906 = vshra.s32 %v1904, 16
  %v1907 = vcvt.s32.f32 %v1905
  %v1908 = vcvt.s32.f32 %v1906
  %1909 = vmin.xlane.f32.xlu0 %v1908
  %v1910 = vpop.xlane.xlu0 %1909
  %vm1911 = vcmp.eq.f32.partialorder %v1908, %v1910
  %v1912 = vsel %vm1911, %v1907, inf
  %1913 = vmin.xlane.f32.xlu0 %v1912
  %v1914 = vpop.xlane.xlu0 %1913
  %v1915 = vcvt.f32.s32 %v1914
  %v1916 = vcvt.f32.s32 %v1910
  %v1917 = vshll.u32 %v1916, 16
  %v1918 = vadd.s32 %v1917, %v1915
  %v1919 = vsel %vm1825, %v1903, 2147483647
  %v1920 = vand.u32 %v1919, 65535
  %v1921 = vshra.s32 %v1919, 16
  %v1922 = vcvt.s32.f32 %v1920
  %v1923 = vcvt.s32.f32 %v1921
  %1924 = vmin.xlane.f32.xlu0 %v1923
  %v1925 = vpop.xlane.xlu0 %1924
  %vm1926 = vcmp.eq.f32.partialorder %v1923, %v1925
  %v1927 = vsel %vm1926, %v1922, inf
  %1928 = vmin.xlane.f32.xlu0 %v1927
  %v1929 = vpop.xlane.xlu0 %1928
  %v1930 = vcvt.f32.s32 %v1929
  %v1931 = vcvt.f32.s32 %v1925
  %v1932 = vshll.u32 %v1931, 16
  %v1933 = vadd.s32 %v1932, %v1930
  %vm1934 = vcmp.eq.s32.totalorder %v1837, %v1918
  %vm1935 = vcmp.eq.s32.totalorder %v1837, %v1933
  %v1936 = vsel %vm1934, %v1885, %v1890
  %v1937 = vsel %vm1935, %v1887, %v1891
  %v1938 = vsel %vm1825, %v1936, 0.0
  %1939 = vadd.xlane.f32.xlu0 %v1938
  %v1940 = vpop.xlane.xlu0 %1939
  %v1941 = vsel %vm1825, %v1937, 0.0
  %1942 = vadd.xlane.f32.xlu0 %v1941
  %v1943 = vpop.xlane.xlu0 %1942
  %v1944 = vrcp.pop %v1940
  %v1945 = vrcp.pop %v1943
  %v1946 = vmul.f32 %v1936, %v1944
  %v1947 = vmul.f32 %v1937, %v1945
  %v1948 = vld [vmem:[%s5 + $0x18] sm:$0xe0]
  %v1949 = vld [vmem:[%s5 + $0x20] sm:$0xe0]
  %v1950 = vld [vmem:[%s5 + $0x28] sm:$0xe0]
  %v1951 = vld [vmem:[%s5 + $0x30] sm:$0x1]
  %v1952 = vld [vmem:[%s5 + $0x38] sm:$0x1]
  %v1953 = vld [vmem:[%s5 + $0x40] sm:$0x1]
  %s1954 = scalar_lea.vmem %s5, 7
  %v1955 = vld [vmem:[%s1954] ss:$8 sm:$0x7]
  %v1957 = vlaneseq
  %v1958 = vshrl.u32 %v1957, 7
  %v1959 = vsub.s32 0, %v1958
  %v1960 = vrot.slane %v1955, %v1959
  %v1961 = vlaneseq
  %v1962 = vshrl.u32 %v1961, 7
  %v1963 = vsub.s32 1, %v1962
  %v1964 = vrot.slane %v1955, %v1963
  %v1965 = vlaneseq
  %v1966 = vshrl.u32 %v1965, 7
  %v1967 = vsub.s32 2, %v1966
  %v1968 = vrot.slane %v1955, %v1967
  %vm1978 = vcmask 1042432
  %v1979 = vrot.slane %v1948, 5
  %v1980 = vrot.slane %v1951, 5
  %v1981 = vsel %vm1978, %v1979, %v1980
  %v1982 = vrot.slane %v1949, 5
  %v1983 = vrot.slane %v1952, 5
  %v1984 = vsel %vm1978, %v1982, %v1983
  %v1985 = vrot.slane %v1950, 5
  %v1986 = vrot.slane %v1953, 5
  %v1987 = vsel %vm1978, %v1985, %v1986
  %v1989 = vsel %vm1825, %v1946, 0
  %v1992 = vsel %vm1825, %v1947, 0
  %vm1994 = vcmask 1043456
  %v1995 = vsel %vm1994, %v1981, 0
  %v1997 = vsel %vm1994, %v1984, 0
  %v1999 = vsel %vm1994, %v1987, 0
  %2001 = vmatprep.subr.mxu0 %v1997
  %2002 = vmatpush1.msra.mxu0 %v1995
  %2003 = vmatprep.subr.mxu0 0.0
  %2004 = vmatpush1.msra.mxu0 0.0
  %2005 = vmatprep.subr.mxu0 0.0
  %2006 = vmatpush1.msra.mxu0 0.0
  %2007 = vmatprep.subr.mxu0 0.0
  %2008 = vmatpush1.msra.mxu0 0.0
  %2009 = vmatprep.subr.mxu0 0.0
  %2010 = vmatpush1.msra.mxu0 0.0
  %2011 = vmatprep.subr.mxu0 0.0
  %2012 = vmatpush1.msra.mxu0 0.0
  %2013 = vmatprep.subr.mxu0 0.0
  %2014 = vmatpush1.msra.mxu0 0.0
  %2015 = vmatprep.subr.mxu0 0.0
  %2016 = vmatpush1.msra.mxu0 0.0
  %2017 = vmatprep.subr.mxu0 0.0
  %2018 = vmatpush1.msra.mxu0 0.0
  %2019 = vmatprep.subr.mxu0 0.0
  %2020 = vmatpush1.msra.mxu0 0.0
  %2021 = vmatprep.subr.mxu0 0.0
  %2022 = vmatpush1.msra.mxu0 0.0
  %2023 = vmatprep.subr.mxu0 0.0
  %2024 = vmatpush1.msra.mxu0 0.0
  %2025 = vmatprep.subr.mxu0 0.0
  %2026 = vmatpush1.msra.mxu0 0.0
  %2027 = vmatprep.subr.mxu0 0.0
  %2028 = vmatpush1.msra.mxu0 0.0
  %2029 = vmatprep.subr.mxu0 0.0
  %2030 = vmatpush1.msra.mxu0 0.0
  %2031 = vmatprep.subr.mxu0 0.0
  %2032 = vmatpush1.msra.mxu0 0.0
  %2033 = vmatprep.subr.mxu0 0.0
  %2034 = vmatpush1.msra.mxu0 0.0
  %2035 = vmatprep.subr.mxu0 0.0
  %2036 = vmatpush1.msra.mxu0 0.0
  %2037 = vmatprep.subr.mxu0 0.0
  %2038 = vmatpush1.msra.mxu0 0.0
  %2039 = vmatprep.subr.mxu0 0.0
  %2040 = vmatpush1.msra.mxu0 0.0
  %2041 = vmatprep.subr.mxu0 0.0
  %2042 = vmatpush1.msra.mxu0 0.0
  %2043 = vmatprep.subr.mxu0 0.0
  %2044 = vmatpush1.msra.mxu0 0.0
  %2045 = vmatprep.subr.mxu0 0.0
  %2046 = vmatpush1.msra.mxu0 0.0
  %2047 = vmatprep.subr.mxu0 0.0
  %2048 = vmatpush1.msra.mxu0 0.0
  %2049 = vmatprep.subr.mxu0 0.0
  %2050 = vmatpush1.msra.mxu0 0.0
  %2051 = vmatprep.subr.mxu0 0.0
  %2052 = vmatpush1.msra.mxu0 0.0
  %2053 = vmatprep.subr.mxu0 0.0
  %2054 = vmatpush1.msra.mxu0 0.0
  %2055 = vmatprep.subr.mxu0 0.0
  %2056 = vmatpush1.msra.mxu0 0.0
  %2057 = vmatprep.subr.mxu0 0.0
  %2058 = vmatpush1.msra.mxu0 0.0
  %2059 = vmatprep.subr.mxu0 0.0
  %2060 = vmatpush1.msra.mxu0 0.0
  %2061 = vmatprep.subr.mxu0 0.0
  %2062 = vmatpush1.msra.mxu0 0.0
  %2063 = vmatprep.subr.mxu0 0.0
  %2064 = vmatpush1.msra.mxu0 0.0
  %2065 = vmatprep.mubr.f32.mxu0 0.0
  %2066 = vmatmul.mubr.f32.gmra.mrb[0].mxu0 %v1989
  %v2067 = vpop.f32.mrb[0].mxu0
  %v2068 = vadd.f32 %v1960, %v2067
  %v2069 = vpop.f32.mrb[0].mxu0
  %v2070 = vadd.f32 %v1964, %v2069
  %2071 = vmatprep.mubr.f32.mxu0 0.0
  %2072 = vmatmul.mubr.f32.gmra.mrb[0].mxu0 %v1992
  %v2073 = vpop.f32.mrb[0].mxu0
  %v2074 = vadd.f32 %v1960, %v2073
  %v2075 = vpop.f32.mrb[0].mxu0
  %v2076 = vadd.f32 %v1964, %v2075
  %2077 = vdwg.mxu0
  %2078 = vmatprep.subr.mxu0 0.0
  %2079 = vmatpush1.msra.mxu0 %v1999
  %2080 = vmatprep.subr.mxu0 0.0
  %2081 = vmatpush1.msra.mxu0 0.0
  %2082 = vmatprep.subr.mxu0 0.0
  %2083 = vmatpush1.msra.mxu0 0.0
  %2084 = vmatprep.subr.mxu0 0.0
  %2085 = vmatpush1.msra.mxu0 0.0
  %2086 = vmatprep.subr.mxu0 0.0
  %2087 = vmatpush1.msra.mxu0 0.0
  %2088 = vmatprep.subr.mxu0 0.0
  %2089 = vmatpush1.msra.mxu0 0.0
  %2090 = vmatprep.subr.mxu0 0.0
  %2091 = vmatpush1.msra.mxu0 0.0
  %2092 = vmatprep.subr.mxu0 0.0
  %2093 = vmatpush1.msra.mxu0 0.0
  %2094 = vmatprep.subr.mxu0 0.0
  %2095 = vmatpush1.msra.mxu0 0.0
  %2096 = vmatprep.subr.mxu0 0.0
  %2097 = vmatpush1.msra.mxu0 0.0
  %2098 = vmatprep.subr.mxu0 0.0
  %2099 = vmatpush1.msra.mxu0 0.0
  %2100 = vmatprep.subr.mxu0 0.0
  %2101 = vmatpush1.msra.mxu0 0.0
  %2102 = vmatprep.subr.mxu0 0.0
  %2103 = vmatpush1.msra.mxu0 0.0
  %2104 = vmatprep.subr.mxu0 0.0
  %2105 = vmatpush1.msra.mxu0 0.0
  %2106 = vmatprep.subr.mxu0 0.0
  %2107 = vmatpush1.msra.mxu0 0.0
  %2108 = vmatprep.subr.mxu0 0.0
  %2109 = vmatpush1.msra.mxu0 0.0
  %2110 = vmatprep.subr.mxu0 0.0
  %2111 = vmatpush1.msra.mxu0 0.0
  %2112 = vmatprep.subr.mxu0 0.0
  %2113 = vmatpush1.msra.mxu0 0.0
  %2114 = vmatprep.subr.mxu0 0.0
  %2115 = vmatpush1.msra.mxu0 0.0
  %2116 = vmatprep.subr.mxu0 0.0
  %2117 = vmatpush1.msra.mxu0 0.0
  %2118 = vmatprep.subr.mxu0 0.0
  %2119 = vmatpush1.msra.mxu0 0.0
  %2120 = vmatprep.subr.mxu0 0.0
  %2121 = vmatpush1.msra.mxu0 0.0
  %2122 = vmatprep.subr.mxu0 0.0
  %2123 = vmatpush1.msra.mxu0 0.0
  %2124 = vmatprep.subr.mxu0 0.0
  %2125 = vmatpush1.msra.mxu0 0.0
  %2126 = vmatprep.subr.mxu0 0.0
  %2127 = vmatpush1.msra.mxu0 0.0
  %2128 = vmatprep.subr.mxu0 0.0
  %2129 = vmatpush1.msra.mxu0 0.0
  %2130 = vmatprep.subr.mxu0 0.0
  %2131 = vmatpush1.msra.mxu0 0.0
  %2132 = vmatprep.subr.mxu0 0.0
  %2133 = vmatpush1.msra.mxu0 0.0
  %2134 = vmatprep.subr.mxu0 0.0
  %2135 = vmatpush1.msra.mxu0 0.0
  %2136 = vmatprep.subr.mxu0 0.0
  %2137 = vmatpush1.msra.mxu0 0.0
  %2138 = vmatprep.subr.mxu0 0.0
  %2139 = vmatpush1.msra.mxu0 0.0
  %2140 = vmatprep.subr.mxu0 0.0
  %2141 = vmatpush1.msra.mxu0 0.0
  %2142 = vmatprep.mubr.f32.mxu0 0.0
  %2143 = vmatmul.mubr.f32.gmra.mrb[0].mxu0 %v1989
  %v2144 = vpop.f32.mrb[0].mxu0
  %v2145 = vadd.f32 %v1968, %v2144
  %v2146 = vpop.f32.mrb[0].mxu0
  %2147 = vmatprep.mubr.f32.mxu0 0.0
  %2148 = vmatmul.mubr.f32.gmra.mrb[0].mxu0 %v1992
  %v2149 = vpop.f32.mrb[0].mxu0
  %v2150 = vadd.f32 %v1968, %v2149
  %v2151 = vpop.f32.mrb[0].mxu0
  %2152 = vdwg.mxu0
  %v2153 = vmul.f32 %v1719, 0.5
  %v2154 = vmul.f32 %v1721, 0.5
  %v2155 = vmul.f32 %v1796, 0.5
  %v2156 = vmul.f32 %v1725, 0.5
  %v2157 = vmul.f32 %v1727, 0.5
  %v2158 = vmul.f32 %v1801, 0.5
  %v2159 = vmul.f32 %v1719, 0.044715
  %v2160 = vmul.f32 %v1721, 0.044715
  %v2161 = vmul.f32 %v1796, 0.044715
  %v2162 = vmul.f32 %v1725, 0.044715
  %v2163 = vmul.f32 %v1727, 0.044715
  %v2164 = vmul.f32 %v1801, 0.044715
  %v2165 = vmul.f32 %v2159, %v1719
  %v2166 = vmul.f32 %v2160, %v1721
  %v2167 = vmul.f32 %v2161, %v1796
  %v2168 = vmul.f32 %v2162, %v1725
  %v2169 = vmul.f32 %v2163, %v1727
  %v2170 = vmul.f32 %v2164, %v1801
  %v2171 = vmul.f32 %v2165, %v1719
  %v2172 = vmul.f32 %v2166, %v1721
  %v2173 = vmul.f32 %v2167, %v1796
  %v2174 = vmul.f32 %v2168, %v1725
  %v2175 = vmul.f32 %v2169, %v1727
  %v2176 = vmul.f32 %v2170, %v1801
  %v2177 = vadd.f32 %v1719, %v2171
  %v2178 = vadd.f32 %v1721, %v2172
  %v2179 = vadd.f32 %v1796, %v2173
  %v2180 = vadd.f32 %v1725, %v2174
  %v2181 = vadd.f32 %v1727, %v2175
  %v2182 = vadd.f32 %v1801, %v2176
  %v2183 = vmul.f32 %v2177, 0.7978846
  %v2184 = vmul.f32 %v2178, 0.7978846
  %v2185 = vmul.f32 %v2179, 0.7978846
  %v2186 = vmul.f32 %v2180, 0.7978846
  %v2187 = vmul.f32 %v2181, 0.7978846
  %v2188 = vmul.f32 %v2182, 0.7978846
  %v2189 = vtanh.pop %v2183
  %v2190 = vtanh.pop %v2184
  %v2191 = vtanh.pop %v2185
  %v2192 = vtanh.pop %v2186
  %v2193 = vtanh.pop %v2187
  %v2194 = vtanh.pop %v2188
  %v2195 = vadd.f32 %v2189, 1.0
  %v2196 = vadd.f32 %v2190, 1.0
  %v2197 = vadd.f32 %v2191, 1.0
  %v2198 = vadd.f32 %v2192, 1.0
  %v2199 = vadd.f32 %v2193, 1.0
  %v2200 = vadd.f32 %v2194, 1.0
  %v2201 = vmul.f32 %v2153, %v2195
  %v2202 = vmul.f32 %v2154, %v2196
  %v2203 = vmul.f32 %v2155, %v2197
  %v2204 = vmul.f32 %v2156, %v2198
  %v2205 = vmul.f32 %v2157, %v2199
  %v2206 = vmul.f32 %v2158, %v2200
  %v2207 = vmul.f32 %v2201, %v2068
  %v2208 = vmul.f32 %v2202, %v2070
  %v2209 = vmul.f32 %v2203, %v2145
  %v2210 = vmul.f32 %v2204, %v2074
  %v2211 = vmul.f32 %v2205, %v2076
  %v2212 = vmul.f32 %v2206, %v2150
  %v2213 = vld [vmem:[%s4] sm:$0xff]
  %v2214 = vld [vmem:[%s4 + $0x8] sm:$0xff]
  %v2215 = vld [vmem:[%s4 + $0x10] sm:$0xff]
  %v2216 = vld [vmem:[%s4 + $0x18] sm:$0xff]
  %v2217 = vld [vmem:[%s4 + $0x20] sm:$0xff]
  %v2218 = vld [vmem:[%s4 + $0x28] sm:$0xff]
  %v2219 = vld [vmem:[%s4 + $0x30] sm:$0xff]
  %v2220 = vld [vmem:[%s4 + $0x38] sm:$0xff]
  %v2221 = vld [vmem:[%s4 + $0x40] sm:$0xff]
  %v2222 = vld [vmem:[%s4 + $0x48] sm:$0xff]
  %v2223 = vld [vmem:[%s4 + $0x50] sm:$0xff]
  %v2224 = vld [vmem:[%s4 + $0x58] sm:$0xff]
  %v2225 = vld [vmem:[%s4 + $0x60] sm:$0xff]
  %v2226 = vld [vmem:[%s4 + $0x68] sm:$0xff]
  %v2227 = vld [vmem:[%s4 + $0x70] sm:$0xff]
  %v2228 = vld [vmem:[%s4 + $0x78] sm:$0xff]
  %v2229 = vld [vmem:[%s4 + $0x80] sm:$0xff]
  %v2230 = vld [vmem:[%s4 + $0x88] sm:$0xff]
  %v2231 = vld [vmem:[%s4 + $0x90] sm:$0xff]
  %v2232 = vld [vmem:[%s4 + $0x98] sm:$0xff]
  %v2233 = vld [vmem:[%s4 + $0xa0] sm:$0xff]
  %v2234 = vld [vmem:[%s4 + $0xa8] sm:$0xff]
  %v2235 = vld [vmem:[%s4 + $0xb0] sm:$0xff]
  %v2236 = vld [vmem:[%s4 + $0xb8] sm:$0xff]
  %v2237 = vld [vmem:[%s4 + $0xc0] sm:$0xff]
  %v2238 = vld [vmem:[%s4 + $0xc8] sm:$0xff]
  %v2239 = vld [vmem:[%s4 + $0xd0] sm:$0xff]
  %v2240 = vld [vmem:[%s4 + $0xd8] sm:$0xff]
  %v2241 = vld [vmem:[%s4 + $0xe0] sm:$0xff]
  %v2242 = vld [vmem:[%s4 + $0xe8] sm:$0xff]
  %v2243 = vld [vmem:[%s4 + $0xf0] sm:$0xff]
  %v2244 = vld [vmem:[%s4 + $0xf8] sm:$0xff]
  %v2245 = vld [vmem:[%s4 + $0x100] sm:$0xff]
  %v2246 = vld [vmem:[%s4 + $0x108] sm:$0xff]
  %v2247 = vld [vmem:[%s4 + $0x110] sm:$0xff]
  %v2248 = vld [vmem:[%s4 + $0x118] sm:$0xff]
  %v2249 = vld [vmem:[%s4 + $0x120] sm:$0xff]
  %v2250 = vld [vmem:[%s4 + $0x128] sm:$0xff]
  %v2251 = vld [vmem:[%s4 + $0x130] sm:$0xff]
  %v2252 = vld [vmem:[%s4 + $0x138] sm:$0xff]
  %v2253 = vld [vmem:[%s4 + $0x140] sm:$0xff]
  %v2254 = vld [vmem:[%s4 + $0x148] sm:$0xff]
  %v2255 = vld [vmem:[%s4 + $0x150] sm:$0xff]
  %v2256 = vld [vmem:[%s4 + $0x158] sm:$0xff]
  %v2257 = vld [vmem:[%s4 + $0x160] sm:$0xff]
  %v2258 = vld [vmem:[%s4 + $0x168] sm:$0xff]
  %v2259 = vld [vmem:[%s4 + $0x170] sm:$0xff]
  %v2260 = vld [vmem:[%s4 + $0x178] sm:$0xff]
  %2261 = vmatprep.subr.mxu0 0.0
  %2262 = vmatpush1.msra.mxu0 %v2213
  %2263 = vmatprep.subr.mxu0 0.0
  %2264 = vmatpush1.msra.mxu0 %v2214
  %2265 = vmatprep.subr.mxu0 0.0
  %2266 = vmatpush1.msra.mxu0 %v2215
  %2267 = vmatprep.subr.mxu0 0.0
  %2268 = vmatpush1.msra.mxu0 %v2216
  %2269 = vmatprep.subr.mxu0 0.0
  %2270 = vmatpush1.msra.mxu0 %v2217
  %2271 = vmatprep.subr.mxu0 0.0
  %2272 = vmatpush1.msra.mxu0 %v2218
  %2273 = vmatprep.subr.mxu0 0.0
  %2274 = vmatpush1.msra.mxu0 %v2219
  %2275 = vmatprep.subr.mxu0 0.0
  %2276 = vmatpush1.msra.mxu0 %v2220
  %2277 = vmatprep.subr.mxu0 0.0
  %2278 = vmatpush1.msra.mxu0 %v2221
  %2279 = vmatprep.subr.mxu0 0.0
  %2280 = vmatpush1.msra.mxu0 %v2222
  %2281 = vmatprep.subr.mxu0 0.0
  %2282 = vmatpush1.msra.mxu0 %v2223
  %2283 = vmatprep.subr.mxu0 0.0
  %2284 = vmatpush1.msra.mxu0 %v2224
  %2285 = vmatprep.subr.mxu0 0.0
  %2286 = vmatpush1.msra.mxu0 %v2225
  %2287 = vmatprep.subr.mxu0 0.0
  %2288 = vmatpush1.msra.mxu0 %v2226
  %2289 = vmatprep.subr.mxu0 0.0
  %2290 = vmatpush1.msra.mxu0 %v2227
  %2291 = vmatprep.subr.mxu0 0.0
  %2292 = vmatpush1.msra.mxu0 %v2228
  %2293 = vmatprep.subr.mxu0 0.0
  %2294 = vmatpush1.msra.mxu0 %v2229
  %2295 = vmatprep.subr.mxu0 0.0
  %2296 = vmatpush1.msra.mxu0 %v2230
  %2297 = vmatprep.subr.mxu0 0.0
  %2298 = vmatpush1.msra.mxu0 %v2231
  %2299 = vmatprep.subr.mxu0 0.0
  %2300 = vmatpush1.msra.mxu0 %v2232
  %2301 = vmatprep.subr.mxu0 0.0
  %2302 = vmatpush1.msra.mxu0 %v2233
  %2303 = vmatprep.subr.mxu0 0.0
  %2304 = vmatpush1.msra.mxu0 %v2234
  %2305 = vmatprep.subr.mxu0 0.0
  %2306 = vmatpush1.msra.mxu0 %v2235
  %2307 = vmatprep.subr.mxu0 0.0
  %2308 = vmatpush1.msra.mxu0 %v2236
  %2309 = vmatprep.subr.mxu0 0.0
  %2310 = vmatpush1.msra.mxu0 %v2237
  %2311 = vmatprep.subr.mxu0 0.0
  %2312 = vmatpush1.msra.mxu0 %v2238
  %2313 = vmatprep.subr.mxu0 0.0
  %2314 = vmatpush1.msra.mxu0 %v2239
  %2315 = vmatprep.subr.mxu0 0.0
  %2316 = vmatpush1.msra.mxu0 %v2240
  %2317 = vmatprep.subr.mxu0 0.0
  %2318 = vmatpush1.msra.mxu0 %v2241
  %2319 = vmatprep.subr.mxu0 0.0
  %2320 = vmatpush1.msra.mxu0 %v2242
  %2321 = vmatprep.subr.mxu0 0.0
  %2322 = vmatpush1.msra.mxu0 %v2243
  %2323 = vmatprep.subr.mxu0 0.0
  %2324 = vmatpush1.msra.mxu0 %v2244
  %2325 = vmatprep.mubr.f32.mxu0 %v2208
  %2326 = vmatmul.mubr.f32.gmra.mrb[0].mxu0 %v2207
  %v2327 = vpop.f32.mrb[0].mxu0
  %v2328 = vadd.f32 0.0, %v2327
  %v2329 = vpop.f32.mrb[0].mxu0
  %2330 = vmatprep.mubr.f32.mxu0 %v2211
  %2331 = vmatmul.mubr.f32.gmra.mrb[0].mxu0 %v2210
  %v2332 = vpop.f32.mrb[0].mxu0
  %v2333 = vadd.f32 0.0, %v2332
  %v2334 = vpop.f32.mrb[0].mxu0
  %2335 = vdwg.mxu0
  %2336 = vmatprep.subr.mxu0 0.0
  %2337 = vmatpush1.msra.mxu0 %v2245
  %2338 = vmatprep.subr.mxu0 0.0
  %2339 = vmatpush1.msra.mxu0 %v2246
  %2340 = vmatprep.subr.mxu0 0.0
  %2341 = vmatpush1.msra.mxu0 %v2247
  %2342 = vmatprep.subr.mxu0 0.0
  %2343 = vmatpush1.msra.mxu0 %v2248
  %2344 = vmatprep.subr.mxu0 0.0
  %2345 = vmatpush1.msra.mxu0 %v2249
  %2346 = vmatprep.subr.mxu0 0.0
  %2347 = vmatpush1.msra.mxu0 %v2250
  %2348 = vmatprep.subr.mxu0 0.0
  %2349 = vmatpush1.msra.mxu0 %v2251
  %2350 = vmatprep.subr.mxu0 0.0
  %2351 = vmatpush1.msra.mxu0 %v2252
  %2352 = vmatprep.subr.mxu0 0.0
  %2353 = vmatpush1.msra.mxu0 %v2253
  %2354 = vmatprep.subr.mxu0 0.0
  %2355 = vmatpush1.msra.mxu0 %v2254
  %2356 = vmatprep.subr.mxu0 0.0
  %2357 = vmatpush1.msra.mxu0 %v2255
  %2358 = vmatprep.subr.mxu0 0.0
  %2359 = vmatpush1.msra.mxu0 %v2256
  %2360 = vmatprep.subr.mxu0 0.0
  %2361 = vmatpush1.msra.mxu0 %v2257
  %2362 = vmatprep.subr.mxu0 0.0
  %2363 = vmatpush1.msra.mxu0 %v2258
  %2364 = vmatprep.subr.mxu0 0.0
  %2365 = vmatpush1.msra.mxu0 %v2259
  %2366 = vmatprep.subr.mxu0 0.0
  %2367 = vmatpush1.msra.mxu0 %v2260
  %2368 = vmatprep.subr.mxu0 0.0
  %2369 = vmatpush1.msra.mxu0 0.0
  %2370 = vmatprep.subr.mxu0 0.0
  %2371 = vmatpush1.msra.mxu0 0.0
  %2372 = vmatprep.subr.mxu0 0.0
  %2373 = vmatpush1.msra.mxu0 0.0
  %2374 = vmatprep.subr.mxu0 0.0
  %2375 = vmatpush1.msra.mxu0 0.0
  %2376 = vmatprep.subr.mxu0 0.0
  %2377 = vmatpush1.msra.mxu0 0.0
  %2378 = vmatprep.subr.mxu0 0.0
  %2379 = vmatpush1.msra.mxu0 0.0
  %2380 = vmatprep.subr.mxu0 0.0
  %2381 = vmatpush1.msra.mxu0 0.0
  %2382 = vmatprep.subr.mxu0 0.0
  %2383 = vmatpush1.msra.mxu0 0.0
  %2384 = vmatprep.subr.mxu0 0.0
  %2385 = vmatpush1.msra.mxu0 0.0
  %2386 = vmatprep.subr.mxu0 0.0
  %2387 = vmatpush1.msra.mxu0 0.0
  %2388 = vmatprep.subr.mxu0 0.0
  %2389 = vmatpush1.msra.mxu0 0.0
  %2390 = vmatprep.subr.mxu0 0.0
  %2391 = vmatpush1.msra.mxu0 0.0
  %2392 = vmatprep.subr.mxu0 0.0
  %2393 = vmatpush1.msra.mxu0 0.0
  %2394 = vmatprep.subr.mxu0 0.0
  %2395 = vmatpush1.msra.mxu0 0.0
  %2396 = vmatprep.subr.mxu0 0.0
  %2397 = vmatpush1.msra.mxu0 0.0
  %2398 = vmatprep.subr.mxu0 0.0
  %2399 = vmatpush1.msra.mxu0 0.0
  %2400 = vmatprep.mubr.f32.mxu0 0.0
  %2401 = vmatmul.mubr.f32.gmra.mrb[0].mxu0 %v2209
  %v2402 = vpop.f32.mrb[0].mxu0
  %v2403 = vadd.f32 %v2328, %v2402
  %v2404 = vpop.f32.mrb[0].mxu0
  %2405 = vmatprep.mubr.f32.mxu0 0.0
  %2406 = vmatmul.mubr.f32.gmra.mrb[0].mxu0 %v2212
  %v2407 = vpop.f32.mrb[0].mxu0
  %v2408 = vadd.f32 %v2333, %v2407
  %v2409 = vpop.f32.mrb[0].mxu0
  %2410 = vdwg.mxu0
  %v2411 = vld [vmem:[%s5 + $0x18] sm:$0x1e]
  %v2412 = vld [vmem:[%s5 + $0x18] ss:$0 sm:$0xff]
  %v2414 = vrot.slane %v2411, 1
  %v2415 = vsel %vm1994, %v2414, 0
  %2417 = vmatprep.subr.mxu0 0.0
  %2418 = vmatpush1.msra.mxu0 %v2415
  %2419 = vmatprep.subr.mxu0 0.0
  %2420 = vmatpush1.msra.mxu0 0.0
  %2421 = vmatprep.subr.mxu0 0.0
  %2422 = vmatpush1.msra.mxu0 0.0
  %2423 = vmatprep.subr.mxu0 0.0
  %2424 = vmatpush1.msra.mxu0 0.0
  %2425 = vmatprep.subr.mxu0 0.0
  %2426 = vmatpush1.msra.mxu0 0.0
  %2427 = vmatprep.subr.mxu0 0.0
  %2428 = vmatpush1.msra.mxu0 0.0
  %2429 = vmatprep.subr.mxu0 0.0
  %2430 = vmatpush1.msra.mxu0 0.0
  %2431 = vmatprep.subr.mxu0 0.0
  %2432 = vmatpush1.msra.mxu0 0.0
  %2433 = vmatprep.subr.mxu0 0.0
  %2434 = vmatpush1.msra.mxu0 0.0
  %2435 = vmatprep.subr.mxu0 0.0
  %2436 = vmatpush1.msra.mxu0 0.0
  %2437 = vmatprep.subr.mxu0 0.0
  %2438 = vmatpush1.msra.mxu0 0.0
  %2439 = vmatprep.subr.mxu0 0.0
  %2440 = vmatpush1.msra.mxu0 0.0
  %2441 = vmatprep.subr.mxu0 0.0
  %2442 = vmatpush1.msra.mxu0 0.0
  %2443 = vmatprep.subr.mxu0 0.0
  %2444 = vmatpush1.msra.mxu0 0.0
  %2445 = vmatprep.subr.mxu0 0.0
  %2446 = vmatpush1.msra.mxu0 0.0
  %2447 = vmatprep.subr.mxu0 0.0
  %2448 = vmatpush1.msra.mxu0 0.0
  %2449 = vmatprep.subr.mxu0 0.0
  %2450 = vmatpush1.msra.mxu0 0.0
  %2451 = vmatprep.subr.mxu0 0.0
  %2452 = vmatpush1.msra.mxu0 0.0
  %2453 = vmatprep.subr.mxu0 0.0
  %2454 = vmatpush1.msra.mxu0 0.0
  %2455 = vmatprep.subr.mxu0 0.0
  %2456 = vmatpush1.msra.mxu0 0.0
  %2457 = vmatprep.subr.mxu0 0.0
  %2458 = vmatpush1.msra.mxu0 0.0
  %2459 = vmatprep.subr.mxu0 0.0
  %2460 = vmatpush1.msra.mxu0 0.0
  %2461 = vmatprep.subr.mxu0 0.0
  %2462 = vmatpush1.msra.mxu0 0.0
  %2463 = vmatprep.subr.mxu0 0.0
  %2464 = vmatpush1.msra.mxu0 0.0
  %2465 = vmatprep.subr.mxu0 0.0
  %2466 = vmatpush1.msra.mxu0 0.0
  %2467 = vmatprep.subr.mxu0 0.0
  %2468 = vmatpush1.msra.mxu0 0.0
  %2469 = vmatprep.subr.mxu0 0.0
  %2470 = vmatpush1.msra.mxu0 0.0
  %2471 = vmatprep.subr.mxu0 0.0
  %2472 = vmatpush1.msra.mxu0 0.0
  %2473 = vmatprep.subr.mxu0 0.0
  %2474 = vmatpush1.msra.mxu0 0.0
  %2475 = vmatprep.subr.mxu0 0.0
  %2476 = vmatpush1.msra.mxu0 0.0
  %2477 = vmatprep.subr.mxu0 0.0
  %2478 = vmatpush1.msra.mxu0 0.0
  %2479 = vmatprep.subr.mxu0 0.0
  %2480 = vmatpush1.msra.mxu0 0.0
  %2481 = vmatprep.mubr.f32.mxu0 0.0
  %2482 = vmatmul.mubr.f32.gmra.mrb[0].mxu0 %v1989
  %v2483 = vpop.f32.mrb[0].mxu0
  %v2484 = vadd.f32 %v2412, %v2483
  %v2485 = vpop.f32.mrb[0].mxu0
  %2486 = vmatprep.mubr.f32.mxu0 0.0
  %2487 = vmatmul.mubr.f32.gmra.mrb[0].mxu0 %v1992
  %v2488 = vpop.f32.mrb[0].mxu0
  %v2489 = vadd.f32 %v2412, %v2488
  %v2490 = vpop.f32.mrb[0].mxu0
  %2491 = vdwg.mxu0
  %v2492 = vadd.f32 %v1582, %v2403
  %v2493 = vadd.f32 %v1583, %v2408
  %v2494 = vadd.f32 %v2492, %v2484
  %v2495 = vadd.f32 %v2493, %v2489
  %2496 = vst.msk [vmem:[%s6] sm:$0xff] %vm27, %v2494
  %2497 = vst.msk [vmem:[%s6 + $0x8] sm:$0xff] %vm27, %v2495
  %2500 = vrot.lane.b32.xlu0 %v1796, 96
  %v2501 = vpop.permute.xlu0 %2500
  %2502 = vrot.lane.b32.xlu0 %v1801, 96
  %v2503 = vpop.permute.xlu0 %2502
  %vm2506 = vcmask 294144
  %2507 = vst.msk [vmem:[%s6] sm:$0xff] %vm2506, %v2501
  %2508 = vst.msk [vmem:[%s6 + $0x8] sm:$0xff] %vm2506, %v2503
  // Predicated region
  $region26: #{sparse_transformer_layer.1} parent=0 // pred_check
    _
  $region27: #{sparse_transformer_layer.1} parent=0 // pred_check_branch
    %2510 = sbr.rel (0) target = $region29
  $region28: #{sparse_transformer_layer.1} parent=0 // pred_region
    _
  $region29: #{sparse_transformer_layer.1} parent=0 // pred_fallthru
    _
  // Predicated region
  $region30: #{sparse_transformer_layer.1} parent=0 // pred_check
    _
  $region31: #{sparse_transformer_layer.1} parent=0 // pred_check_branch
    %2512 = sbr.rel (0) target = $region33
  $region32: #{sparse_transformer_layer.1} parent=0 // pred_region
    _
  $region33: #{sparse_transformer_layer.1} parent=0 // pred_fallthru
    _

</llo_original>
